<compile_context>
chip_gen: v5e
topology: v5e:2x2
jax: 0.10.0
libtpu: 0.0.40
codegen_flags: <defaults>
</compile_context>

<pallas_src>
import functools

import jax
import jax.numpy as jnp
from jax import lax
from jax.experimental import pallas as pl
from jax.experimental.pallas import tpu as pltpu

# MXU operand dtype (review: bf16 operands on v5e/v6e/v7x); accumulation,
# LayerNorm and softmax stay f32.  pl.reciprocal(approx=True) adds ~1e-3
# relative error in the softmax denominator (documented tolerance).
_MATMUL_DTYPE = jnp.bfloat16

# Row indices of the packed per-layer (9, E) bias / LayerNorm-parameter block.
(_V_SA_BO, _V_N1_G, _V_N1_B, _V_CA_BO, _V_TN1_G, _V_TN1_B,
 _V_FF_B2, _V_TN2_G, _V_TN2_B) = range(9)
_NUM_VECS = 9


# --------------------------------------------------------------------------
# Fused whole-decoder kernel (grid = (batch, layer))
# --------------------------------------------------------------------------

def _decoder_stack_kernel(
        x_ref, enc_ref, tbias_ref, sbias_ref,
        sa_wq_ref, sa_wk_ref, sa_wv_ref, sa_wo_ref,
        ca_wq_ref, ca_wk_ref, ca_wv_ref, ca_wo_ref,
        ff_w1_ref, ff_w2_ref, ff_b1_ref, vec_ref,
        o_ref, act_ref, *, heads, embed, eps):
    """One decoder layer for one batch element; activation resident in VMEM.

    x_ref/enc_ref: (1,L,E)/(1,S,E); tbias/sbias: (L,L)/(L,S) additive biases.
    q/k/v weights: per-head (H, E, D) slabs; wo: (H, D, E).  act_ref persists
    across the layer grid axis (init at layer 0, flushed at the last layer).
    """
    layer = pl.program_id(1)
    bf16 = _MATMUL_DTYPE

    @pl.when(layer == 0)
    def _():
        act_ref[...] = x_ref[0].astype(jnp.float32)

    x = act_ref[...]                 # (L, E)  f32
    enc = enc_ref[0]                 # (S, E)  bf16
    vecs = vec_ref[0]                # (9, E)  f32
    inv_sqrt_e = 1.0 / float(embed) ** 0.5

    def vrow(i):                     # (1, E) row of the packed parameter block
        return vecs[i:i + 1, :]

    def mha(q_in, kv_in, bias, wq, wk, wv, wo, bo):
        """Multi-head attention, batched over a leading head axis (no per-head
        lane slices / stack / concatenate relayouts)."""
        H = heads
        qb = jnp.broadcast_to(q_in.astype(bf16)[None], (H,) + q_in.shape)
        kb = jnp.broadcast_to(kv_in.astype(bf16)[None], (H,) + kv_in.shape)
        # Projections: (H, L, E) x (H, E, D) -> (H, L, D), f32 accumulation.
        qh = jnp.einsum('hqe,hed->hqd', qb, wq, preferred_element_type=jnp.float32)
        kh = jnp.einsum('hke,hed->hkd', kb, wk, preferred_element_type=jnp.float32)
        vh = jnp.einsum('hke,hed->hkd', kb, wv, preferred_element_type=jnp.float32)
        # Scores + additive mask, then scale (masked_fill-before-scale, as in
        # the PyTorch reference: product / sqrt(embed)).
        s = jnp.einsum('hqd,hkd->hqk', qh.astype(bf16), kh.astype(bf16),
                       preferred_element_type=jnp.float32)
        s = (s + bias[None, :, :]) * inv_sqrt_e
        s = s - jnp.max(s, axis=-1, keepdims=True)
        e = jnp.exp(s)
        p = e * pl.reciprocal(jnp.sum(e, axis=-1, keepdims=True), approx=True)
        ctx = jnp.einsum('hqk,hkd->hqd', p.astype(bf16), vh.astype(bf16),
                         preferred_element_type=jnp.float32)
        # Output projection: per-head (D, E) slabs summed over heads is exactly
        # concat(heads) @ Wo.
        outh = jnp.einsum('hqd,hde->hqe', ctx.astype(bf16), wo,
                          preferred_element_type=jnp.float32)   # (H, Lq, E)
        out = outh[0]
        for h in range(1, H):
            out = out + outh[h]
        return out + bo

    def add_ln(a, b, g, beta):
        v = a + b                                              # (L, E) f32
        mu = jnp.mean(v, axis=-1, keepdims=True)
        var = jnp.mean(jnp.square(v - mu), axis=-1, keepdims=True)
        return (v - mu) * lax.rsqrt(var + eps) * g + beta

    # masked self-attention -> add & LayerNorm
    attn = mha(x, x, tbias_ref[...],
               sa_wq_ref[0], sa_wk_ref[0], sa_wv_ref[0], sa_wo_ref[0],
               vrow(_V_SA_BO))
    q = add_ln(attn, x, vrow(_V_N1_G), vrow(_V_N1_B))
    # cross-attention with encoder output -> add & LayerNorm
    attn2 = mha(q, enc, sbias_ref[...],
                ca_wq_ref[0], ca_wk_ref[0], ca_wv_ref[0], ca_wo_ref[0],
                vrow(_V_CA_BO))
    y = add_ln(attn2, q, vrow(_V_TN1_G), vrow(_V_TN1_B))
    # FFN -> add & LayerNorm
    # TODO(synk): at realistic E/F, tile ff_w1/ff_w2 over F with an extra grid
    # axis to fit v7x's 64 MiB VMEM; unnecessary at these tiny shapes.
    hdn = jnp.maximum(
        jnp.dot(y.astype(bf16), ff_w1_ref[0], preferred_element_type=jnp.float32)
        + ff_b1_ref[0], 0.0)
    ff = jnp.dot(hdn.astype(bf16), ff_w2_ref[0],
                 preferred_element_type=jnp.float32) + vrow(_V_FF_B2)
    new_act = add_ln(ff, y, vrow(_V_TN2_G), vrow(_V_TN2_B))
    act_ref[...] = new_act

    @pl.when(layer == pl.num_programs(1) - 1)
    def _():
        o_ref[0] = new_act.astype(o_ref.dtype)


def _vocab_kernel(x_ref, w_ref, b_ref, o_ref):
    """y = x @ W + b for one (rows, TN) lane-dense output tile."""
    o_ref[...] = (jnp.dot(x_ref[...], w_ref[...],
                          preferred_element_type=jnp.float32)
                  + b_ref[...]).astype(o_ref.dtype)


# --------------------------------------------------------------------------
# pallas_call wrappers
# --------------------------------------------------------------------------

def decoder_stack(x, enc, trg_bias, src_bias, params, *, heads, eps=1e-5):
    """All decoder layers in ONE pallas_call.  grid = (batch, num_layers)."""
    N, L, E = x.shape
    S = enc.shape[1]
    H = heads
    D = E // H
    num_layers, _, F = params["ff_w1"].shape
    kernel = functools.partial(_decoder_stack_kernel, heads=H, embed=E, eps=eps)

    def batch_spec(*shape):     # per-batch-element blocks (x, enc_out, output)
        return pl.BlockSpec((1,) + shape, lambda n, l: (n,) + (0,) * len(shape))

    def layer_spec(*shape):     # per-layer stacked weights, prefetched over l
        return pl.BlockSpec((1,) + shape, lambda n, l: (l,) + (0,) * len(shape))

    def const_spec(*shape):     # grid-constant blocks (shared mask biases)
        # TODO(synk): pipeline_mode=pl.Buffered(1) would drop the wasted double
        # buffer for these never-changing blocks at realistic sizes.
        return pl.BlockSpec(shape, lambda n, l: (0,) * len(shape))

    in_specs = [
        batch_spec(L, E),            # x
        batch_spec(S, E),            # enc_out (bf16)
        const_spec(L, L),            # trg additive bias
        const_spec(L, S),            # src additive bias
        layer_spec(H, E, D), layer_spec(H, E, D), layer_spec(H, E, D),  # sa q,k,v
        layer_spec(H, D, E),                                            # sa out
        layer_spec(H, E, D), layer_spec(H, E, D), layer_spec(H, E, D),  # ca q,k,v
        layer_spec(H, D, E),                                            # ca out
        layer_spec(E, F), layer_spec(F, E),                             # ffn w1,w2
        layer_spec(1, F),                                               # ffn b1
        layer_spec(_NUM_VECS, E),                                       # packed vecs
    ]
    operands = (
        x, enc, trg_bias, src_bias,
        params["sa_wq"], params["sa_wk"], params["sa_wv"], params["sa_wo"],
        params["ca_wq"], params["ca_wk"], params["ca_wv"], params["ca_wo"],
        params["ff_w1"], params["ff_w2"], params["ff_b1"], params["vecs"],
    )
    return pl.pallas_call(
        kernel,
        out_shape=jax.ShapeDtypeStruct((N, L, E), jnp.float32),
        grid=(N, num_layers),
        in_specs=in_specs,
        out_specs=pl.BlockSpec((1, L, E), lambda n, l: (n, 0, 0)),
        scratch_shapes=[pltpu.VMEM((L, E), jnp.float32)],   # resident activation
        compiler_params=pltpu.CompilerParams(
            dimension_semantics=("parallel", "arbitrary"),
            vmem_limit_bytes=32 * 1024 * 1024),
    )(*operands)


def vocab_projection(x, w_pad, b_pad, vocab):
    """fc_out: rows flattened to (N*L, E); vocab lane-padded to a 128 multiple
    and tiled with a real grid so it streams at realistic vocab sizes."""
    N, L, E = x.shape
    Vp = w_pad.shape[1]
    rows = N * L
    xf = x.reshape(rows, E).astype(w_pad.dtype)      # bf16 MXU operand rows
    tm = rows if rows <= 256 else 256                # TODO(synk): pad rows to a
    tn = 512 if Vp % 512 == 0 else 128               #  multiple of tm for long seqs
    out = pl.pallas_call(
        _vocab_kernel,
        out_shape=jax.ShapeDtypeStruct((rows, Vp), jnp.float32),
        grid=(pl.cdiv(rows, tm), Vp // tn),
        in_specs=[pl.BlockSpec((tm, E), lambda i, j: (i, 0)),
                  pl.BlockSpec((E, tn), lambda i, j: (0, j)),
                  pl.BlockSpec((1, tn), lambda i, j: (0, j))],
        out_specs=pl.BlockSpec((tm, tn), lambda i, j: (i, j)),
        compiler_params=pltpu.CompilerParams(
            dimension_semantics=("parallel", "parallel")),
    )(xf, w_pad, b_pad)
    return out[:, :vocab].reshape(N, L, vocab)


# --------------------------------------------------------------------------
# Parameter construction (deterministic, synthetic)
# --------------------------------------------------------------------------

def _attn_params(key, embed, heads, scale):
    """Per-head weights; the reference shares one (D, D) linear across heads."""
    D = embed // heads
    kq, kk, kv, ko, kb = jax.random.split(key, 5)

    def head_slabs(k):
        # (H, E, D): slab[h] is zero except rows [h*D:(h+1)*D] = the shared
        # (D, D) weight, so  x @ slab[h] == x[:, h*D:(h+1)*D] @ w_dd.
        w_dd = scale * jax.random.normal(k, (D, D), jnp.float32)
        slab = jnp.zeros((heads, embed, D), jnp.float32)
        for h in range(heads):
            slab = slab.at[h, h * D:(h + 1) * D, :].set(w_dd)
        return slab

    wq, wk, wv = head_slabs(kq), head_slabs(kk), head_slabs(kv)
    wo = (scale * jax.random.normal(ko, (embed, embed), jnp.float32)
          ).reshape(heads, D, embed)               # fc_out weight, head-split rows
    bo = scale * jax.random.normal(kb, (embed,), jnp.float32)
    return wq, wk, wv, wo, bo


def _ln_params(key, embed):
    k1, k2 = jax.random.split(key)
    g = 1.0 + 0.01 * jax.random.normal(k1, (embed,), jnp.float32)
    b = 0.01 * jax.random.normal(k2, (embed,), jnp.float32)
    return g, b


def init_decoder_params(key, *, vocab, embed, num_layers, heads,
                        forward_expansion, max_length):
    F = forward_expansion * embed
    s = 0.02
    vocab_pad = ((vocab + 127) // 128) * 128        # lane-dense output columns
    keys = jax.random.split(key, 4 + num_layers)
    fc_w = s * jax.random.normal(keys[2], (embed, vocab), jnp.float32)
    fc_b = s * jax.random.normal(keys[3], (1, vocab), jnp.float32)

    names = ("sa_wq", "sa_wk", "sa_wv", "sa_wo", "ca_wq", "ca_wk", "ca_wv",
             "ca_wo", "ff_w1", "ff_w2", "ff_b1", "vecs")
    stacks = {name: [] for name in names}
    for li in range(num_layers):
        lk = jax.random.split(keys[4 + li], 9)
        sa_wq, sa_wk, sa_wv, sa_wo, sa_bo = _attn_params(lk[0], embed, heads, s)
        ca_wq, ca_wk, ca_wv, ca_wo, ca_bo = _attn_params(lk[1], embed, heads, s)
        n1_g, n1_b = _ln_params(lk[2], embed)        # DecoderBlock.norm1
        tn1_g, tn1_b = _ln_params(lk[3], embed)      # TransformerBlock.norm1
        tn2_g, tn2_b = _ln_params(lk[4], embed)      # TransformerBlock.norm2
        ff_w1 = s * jax.random.normal(lk[5], (embed, F), jnp.float32)
        ff_b1 = s * jax.random.normal(lk[6], (1, F), jnp.float32)
        ff_w2 = s * jax.random.normal(lk[7], (F, embed), jnp.float32)
        ff_b2 = s * jax.random.normal(lk[8], (embed,), jnp.float32)
        vecs = jnp.stack([sa_bo, n1_g, n1_b, ca_bo, tn1_g, tn1_b,
                          ff_b2, tn2_g, tn2_b], axis=0)          # (9, E)
        for name, val in zip(names, (sa_wq, sa_wk, sa_wv, sa_wo, ca_wq, ca_wk,
                                     ca_wv, ca_wo, ff_w1, ff_w2, ff_b1, vecs)):
            stacks[name].append(val)

    # Weights stored in HBM as bf16 (MXU operand dtype; halves DMA + VMEM);
    # bias / LayerNorm vectors stay f32.
    params = {
        "word_emb": s * jax.random.normal(keys[0], (vocab, embed), jnp.float32),
        "pos_emb": s * jax.random.normal(keys[1], (max_length, embed), jnp.float32),
        "fc_w": jnp.pad(fc_w, ((0, 0), (0, vocab_pad - vocab))).astype(_MATMUL_DTYPE),
        "fc_b": jnp.pad(fc_b, ((0, 0), (0, vocab_pad - vocab))),
    }
    for name in ("sa_wq", "sa_wk", "sa_wv", "sa_wo",
                 "ca_wq", "ca_wk", "ca_wv", "ca_wo", "ff_w1", "ff_w2"):
        params[name] = jnp.stack(stacks[name], axis=0).astype(_MATMUL_DTYPE)
    params["ff_b1"] = jnp.stack(stacks["ff_b1"], axis=0)   # (num_layers, 1, F) f32
    params["vecs"] = jnp.stack(stacks["vecs"], axis=0)     # (num_layers, 9, E) f32
    return params


# --------------------------------------------------------------------------
# Decoder forward pass
# --------------------------------------------------------------------------

@functools.partial(jax.jit, static_argnames=("heads", "vocab"))
def decoder_forward(params, x_ids, enc_out, src_mask, trg_mask, *, heads, vocab):
    N, L = x_ids.shape
    pos = jnp.arange(L, dtype=jnp.int32)
    # embedding gathers: data-dependent, kept in plain JAX (glue)
    h = params["pos_emb"][pos][None, :, :] + \
        jnp.take(params["word_emb"], x_ids, axis=0)            # (N, L, E) f32
    # dropout -> identity (eval semantics)

    # 2-D additive mask biases, shared across batch & heads (no N-duplicated
    # mask DMA).  Matches masked_fill(-1e20) + softmax up to the documented
    # bf16/approx-reciprocal tolerance.
    # TODO(synk): a purely causal trg_mask could be generated in-kernel from
    # broadcasted_iota at long sequence lengths; kept as a runtime input here
    # because the PyTorch forward takes src_mask/trg_mask as arguments.
    trg_bias = jnp.where(trg_mask == 0, -1e20, 0.0).astype(jnp.float32)
    src_bias = jnp.where(src_mask == 0, -1e20, 0.0).astype(jnp.float32)

    h = decoder_stack(h, enc_out.astype(_MATMUL_DTYPE), trg_bias, src_bias,
                      params, heads=heads)
    return vocab_projection(h, params["fc_w"], params["fc_b"], vocab)


# --------------------------------------------------------------------------
# Main
# --------------------------------------------------------------------------

if __name__ == "__main__":
    N = 2
    TRG_LEN = 8
    SRC_LEN = 8
    EMBED = 32
    HEADS = 4
    NUM_LAYERS = 2
    FWD_EXP = 2
    VOCAB = 50
    MAX_LEN = 16

    root = jax.random.PRNGKey(0)
    k_param, k_ids, k_enc = jax.random.split(root, 3)

    params = init_decoder_params(
        k_param, vocab=VOCAB, embed=EMBED, num_layers=NUM_LAYERS, heads=HEADS,
        forward_expansion=FWD_EXP, max_length=MAX_LEN)

    x_ids = jax.random.randint(k_ids, (N, TRG_LEN), 0, VOCAB, dtype=jnp.int32)
    enc_out = jax.random.normal(k_enc, (N, SRC_LEN, EMBED), jnp.float32)

    # 2-D masks (broadcast over batch & heads, as in the PyTorch masked_fill);
    # 0 => masked
    trg_mask = jnp.tril(jnp.ones((TRG_LEN, TRG_LEN), jnp.float32))
    src_mask = jnp.ones((TRG_LEN, SRC_LEN), jnp.float32)

    out = decoder_forward(params, x_ids, enc_out, src_mask, trg_mask,
                          heads=HEADS, vocab=VOCAB)
    out = jax.block_until_ready(out)

    assert out.shape == (N, TRG_LEN, VOCAB), out.shape
    assert bool(jnp.isfinite(out).all())
    print("KERNEL_OK")
</pallas_src>

<mosaic_0001>
module attributes {stable_mosaic.version = 11 : i64} {
  func.func @_vocab_kernel(%arg0: i32, %arg1: i32, %arg2: memref<16x32xbf16, #tpu.memory_space<vmem>>, %arg3: memref<32x128xbf16, #tpu.memory_space<vmem>>, %arg4: memref<1x128xf32, #tpu.memory_space<vmem>>, %arg5: memref<16x128xf32, #tpu.memory_space<vmem>>) attributes {dimension_semantics = [#tpu.dimension_semantics<parallel>, #tpu.dimension_semantics<parallel>], iteration_bounds = array<i64: 1, 1>, scalar_prefetch = 0 : i64, scratch_operands = 0 : i64, tpu.core_type = #tpu.core_type<tc>, window_params = [{transform_indices = @transform_0, window_bounds = array<i64: 16, 32>}, {transform_indices = @transform_1, window_bounds = array<i64: 32, 128>}, {transform_indices = @transform_2, window_bounds = array<i64: 1, 128>}, {transform_indices = @transform_3, window_bounds = array<i64: 16, 128>}]} {
    %c0 = arith.constant 0 : index
    %c0_0 = arith.constant 0 : index
    %0 = vector.load %arg2[%c0, %c0_0] : memref<16x32xbf16, #tpu.memory_space<vmem>>, vector<16x32xbf16>
    %c0_1 = arith.constant 0 : index
    %c0_2 = arith.constant 0 : index
    %1 = vector.load %arg3[%c0_1, %c0_2] : memref<32x128xbf16, #tpu.memory_space<vmem>>, vector<32x128xbf16>
    %cst = arith.constant dense<0.000000e+00> : vector<16x128xf32>
    %2 = tpu.matmul %0, %1, %cst {dimension_numbers = #tpu.dot_dimension_numbers<[1], [0], [0], [1], [0, 0, 1, 1], [], []>} : vector<16x32xbf16>, vector<32x128xbf16>, vector<16x128xf32> -> vector<16x128xf32>
    %c0_3 = arith.constant 0 : index
    %c0_4 = arith.constant 0 : index
    %3 = vector.load %arg4[%c0_3, %c0_4] : memref<1x128xf32, #tpu.memory_space<vmem>>, vector<1x128xf32>
    %4 = vector.broadcast %3 : vector<1x128xf32> to vector<16x128xf32>
    %5 = arith.addf %2, %4 : vector<16x128xf32>
    %c0_5 = arith.constant 0 : index
    %c0_6 = arith.constant 0 : index
    %6 = vector.load %arg5[%c0_5, %c0_6] : memref<16x128xf32, #tpu.memory_space<vmem>>, vector<16x128xf32>
    tpu.vector_store %arg5[%c0_5, %c0_6], %5 {strides = array<i32>} : memref<16x128xf32, #tpu.memory_space<vmem>>, vector<16x128xf32>,
    return
  }
  func.func @transform_0(%arg0: i32, %arg1: i32) -> (i32, i32) {
    %c0_i32 = arith.constant 0 : i32
    %c0_i32_0 = arith.constant 0 : i32
    return %arg0, %c0_i32 : i32, i32
  }
  func.func @transform_1(%arg0: i32, %arg1: i32) -> (i32, i32) {
    %c0_i32 = arith.constant 0 : i32
    %c0_i32_0 = arith.constant 0 : i32
    return %c0_i32, %arg1 : i32, i32
  }
  func.func @transform_2(%arg0: i32, %arg1: i32) -> (i32, i32) {
    %c0_i32 = arith.constant 0 : i32
    %c0_i32_0 = arith.constant 0 : i32
    return %c0_i32, %arg1 : i32, i32
  }
  func.func @transform_3(%arg0: i32, %arg1: i32) -> (i32, i32) {
    %c0_i32 = arith.constant 0 : i32
    return %arg0, %arg1 : i32, i32
  }
}

module attributes {stable_mosaic.version = 11 : i64} {
  func.func @_decoder_stack_kernel(%arg0: i32, %arg1: i32, %arg2: memref<1x8x32xf32, #tpu.memory_space<vmem>>, %arg3: memref<1x8x32xbf16, #tpu.memory_space<vmem>>, %arg4: memref<8x8xf32, #tpu.memory_space<vmem>>, %arg5: memref<8x8xf32, #tpu.memory_space<vmem>>, %arg6: memref<1x4x32x8xbf16, #tpu.memory_space<vmem>>, %arg7: memref<1x4x32x8xbf16, #tpu.memory_space<vmem>>, %arg8: memref<1x4x32x8xbf16, #tpu.memory_space<vmem>>, %arg9: memref<1x4x8x32xbf16, #tpu.memory_space<vmem>>, %arg10: memref<1x4x32x8xbf16, #tpu.memory_space<vmem>>, %arg11: memref<1x4x32x8xbf16, #tpu.memory_space<vmem>>, %arg12: memref<1x4x32x8xbf16, #tpu.memory_space<vmem>>, %arg13: memref<1x4x8x32xbf16, #tpu.memory_space<vmem>>, %arg14: memref<1x32x64xbf16, #tpu.memory_space<vmem>>, %arg15: memref<1x64x32xbf16, #tpu.memory_space<vmem>>, %arg16: memref<1x1x64xf32, #tpu.memory_space<vmem>>, %arg17: memref<1x9x32xf32, #tpu.memory_space<vmem>>, %arg18: memref<1x8x32xf32, #tpu.memory_space<vmem>>, %arg19: memref<8x32xf32, #tpu.memory_space<vmem>>) attributes {dimension_semantics = [#tpu.dimension_semantics<parallel>, #tpu.dimension_semantics<arbitrary>], iteration_bounds = array<i64: 2, 2>, scalar_prefetch = 0 : i64, scratch_operands = 1 : i64, tpu.core_type = #tpu.core_type<tc>, window_params = [{transform_indices = @transform_0, window_bounds = array<i64: 1, 8, 32>}, {transform_indices = @transform_1, window_bounds = array<i64: 1, 8, 32>}, {pipeline_mode = #tpu.pipeline_mode<synchronous>, transform_indices = @transform_2, window_bounds = array<i64: 8, 8>}, {pipeline_mode = #tpu.pipeline_mode<synchronous>, transform_indices = @transform_3, window_bounds = array<i64: 8, 8>}, {transform_indices = @transform_4, window_bounds = array<i64: 1, 4, 32, 8>}, {transform_indices = @transform_5, window_bounds = array<i64: 1, 4, 32, 8>}, {transform_indices = @transform_6, window_bounds = array<i64: 1, 4, 32, 8>}, {transform_indices = @transform_7, window_bounds = array<i64: 1, 4, 8, 32>}, {transform_indices = @transform_8, window_bounds = array<i64: 1, 4, 32, 8>}, {transform_indices = @transform_9, window_bounds = array<i64: 1, 4, 32, 8>}, {transform_indices = @transform_10, window_bounds = array<i64: 1, 4, 32, 8>}, {transform_indices = @transform_11, window_bounds = array<i64: 1, 4, 8, 32>}, {transform_indices = @transform_12, window_bounds = array<i64: 1, 32, 64>}, {transform_indices = @transform_13, window_bounds = array<i64: 1, 64, 32>}, {transform_indices = @transform_14, window_bounds = array<i64: 1, 1, 64>}, {transform_indices = @transform_15, window_bounds = array<i64: 1, 9, 32>}, {transform_indices = @transform_16, window_bounds = array<i64: 1, 8, 32>}]} {
    %c0_i32 = arith.constant 0 : i32
    %0 = arith.cmpi eq, %arg1, %c0_i32 : i32
    %1 = arith.extui %0 : i1 to i32
    %c0_i32_0 = arith.constant 0 : i32
    %2 = arith.cmpi ne, %1, %c0_i32_0 : i32
    scf.if %2 {
      %c0_91 = arith.constant 0 : index
      %c0_92 = arith.constant 0 : index
      %c0_93 = arith.constant 0 : index
      %217 = vector.load %arg2[%c0_91, %c0_92, %c0_93] : memref<1x8x32xf32, #tpu.memory_space<vmem>>, vector<1x8x32xf32>
      %218 = vector.shape_cast %217 : vector<1x8x32xf32> to vector<8x32xf32>
      %c0_94 = arith.constant 0 : index
      %c0_95 = arith.constant 0 : index
      %219 = vector.load %arg19[%c0_94, %c0_95] : memref<8x32xf32, #tpu.memory_space<vmem>>, vector<8x32xf32>
      tpu.vector_store %arg19[%c0_94, %c0_95], %218 {strides = array<i32>} : memref<8x32xf32, #tpu.memory_space<vmem>>, vector<8x32xf32>,
    } else {
    }
    %c0 = arith.constant 0 : index
    %c0_1 = arith.constant 0 : index
    %3 = vector.load %arg19[%c0, %c0_1] : memref<8x32xf32, #tpu.memory_space<vmem>>, vector<8x32xf32>
    %c0_2 = arith.constant 0 : index
    %c0_3 = arith.constant 0 : index
    %c0_4 = arith.constant 0 : index
    %4 = vector.load %arg3[%c0_2, %c0_3, %c0_4] : memref<1x8x32xbf16, #tpu.memory_space<vmem>>, vector<1x8x32xbf16>
    %5 = vector.shape_cast %4 : vector<1x8x32xbf16> to vector<8x32xbf16>
    %c0_5 = arith.constant 0 : index
    %c0_6 = arith.constant 0 : index
    %c0_7 = arith.constant 0 : index
    %6 = vector.load %arg17[%c0_5, %c0_6, %c0_7] : memref<1x9x32xf32, #tpu.memory_space<vmem>>, vector<1x9x32xf32>
    %7 = vector.shape_cast %6 : vector<1x9x32xf32> to vector<9x32xf32>
    %c0_8 = arith.constant 0 : index
    %c0_9 = arith.constant 0 : index
    %8 = vector.load %arg4[%c0_8, %c0_9] : memref<8x8xf32, #tpu.memory_space<vmem>>, vector<8x8xf32>
    %c0_10 = arith.constant 0 : index
    %c0_11 = arith.constant 0 : index
    %c0_12 = arith.constant 0 : index
    %c0_13 = arith.constant 0 : index
    %9 = vector.load %arg6[%c0_10, %c0_11, %c0_12, %c0_13] : memref<1x4x32x8xbf16, #tpu.memory_space<vmem>>, vector<1x4x32x8xbf16>
    %10 = vector.shape_cast %9 : vector<1x4x32x8xbf16> to vector<4x32x8xbf16>
    %c0_14 = arith.constant 0 : index
    %c0_15 = arith.constant 0 : index
    %c0_16 = arith.constant 0 : index
    %c0_17 = arith.constant 0 : index
    %11 = vector.load %arg7[%c0_14, %c0_15, %c0_16, %c0_17] : memref<1x4x32x8xbf16, #tpu.memory_space<vmem>>, vector<1x4x32x8xbf16>
    %12 = vector.shape_cast %11 : vector<1x4x32x8xbf16> to vector<4x32x8xbf16>
    %c0_18 = arith.constant 0 : index
    %c0_19 = arith.constant 0 : index
    %c0_20 = arith.constant 0 : index
    %c0_21 = arith.constant 0 : index
    %13 = vector.load %arg8[%c0_18, %c0_19, %c0_20, %c0_21] : memref<1x4x32x8xbf16, #tpu.memory_space<vmem>>, vector<1x4x32x8xbf16>
    %14 = vector.shape_cast %13 : vector<1x4x32x8xbf16> to vector<4x32x8xbf16>
    %c0_22 = arith.constant 0 : index
    %c0_23 = arith.constant 0 : index
    %c0_24 = arith.constant 0 : index
    %c0_25 = arith.constant 0 : index
    %15 = vector.load %arg9[%c0_22, %c0_23, %c0_24, %c0_25] : memref<1x4x8x32xbf16, #tpu.memory_space<vmem>>, vector<1x4x8x32xbf16>
    %16 = vector.shape_cast %15 : vector<1x4x8x32xbf16> to vector<4x8x32xbf16>
    %17 = vector.extract_strided_slice %7 {offsets = [0, 0], sizes = [1, 32], strides = [1, 1]} : vector<9x32xf32> to vector<1x32xf32>
    %18 = arith.truncf %3 : vector<8x32xf32> to vector<8x32xbf16>
    %19 = vector.shape_cast %18 : vector<8x32xbf16> to vector<1x8x32xbf16>
    %20 = vector.shape_cast %19 : vector<1x8x32xbf16> to vector<1x8x32xbf16>
    %21 = vector.broadcast %20 : vector<1x8x32xbf16> to vector<4x8x32xbf16>
    %22 = arith.truncf %3 : vector<8x32xf32> to vector<8x32xbf16>
    %23 = vector.shape_cast %22 : vector<8x32xbf16> to vector<1x8x32xbf16>
    %24 = vector.shape_cast %23 : vector<1x8x32xbf16> to vector<1x8x32xbf16>
    %25 = vector.broadcast %24 : vector<1x8x32xbf16> to vector<4x8x32xbf16>
    "tpu.trace_start"() <{level = 10 : i32, message = "hqe,hed->hqd"}> : () -> ()
    %cst = arith.constant dense<0.000000e+00> : vector<4x8x8xf32>
    %26 = tpu.matmul %21, %10, %cst {dimension_numbers = #tpu.dot_dimension_numbers<[2], [1], [1], [2], [0, 0, 0, 1, 1, 2], [0], [0]>} : vector<4x8x32xbf16>, vector<4x32x8xbf16>, vector<4x8x8xf32> -> vector<4x8x8xf32>
    "tpu.trace_stop"() : () -> ()
    "tpu.trace_start"() <{level = 10 : i32, message = "hke,hed->hkd"}> : () -> ()
    %cst_26 = arith.constant dense<0.000000e+00> : vector<4x8x8xf32>
    %27 = tpu.matmul %25, %12, %cst_26 {dimension_numbers = #tpu.dot_dimension_numbers<[2], [1], [1], [2], [0, 0, 0, 1, 1, 2], [0], [0]>} : vector<4x8x32xbf16>, vector<4x32x8xbf16>, vector<4x8x8xf32> -> vector<4x8x8xf32>
    %cst_27 = arith.constant dense<0.000000e+00> : vector<4x8x8xf32>
    %28 = tpu.matmul %25, %14, %cst_27 {dimension_numbers = #tpu.dot_dimension_numbers<[2], [1], [1], [2], [0, 0, 0, 1, 1, 2], [0], [0]>} : vector<4x8x32xbf16>, vector<4x32x8xbf16>, vector<4x8x8xf32> -> vector<4x8x8xf32>
    "tpu.trace_stop"() : () -> ()
    %29 = arith.truncf %26 : vector<4x8x8xf32> to vector<4x8x8xbf16>
    %30 = arith.truncf %27 : vector<4x8x8xf32> to vector<4x8x8xbf16>
    "tpu.trace_start"() <{level = 10 : i32, message = "hqd,hkd->hqk"}> : () -> ()
    %cst_28 = arith.constant dense<0.000000e+00> : vector<4x8x8xf32>
    %31 = tpu.matmul %29, %30, %cst_28 {dimension_numbers = #tpu.dot_dimension_numbers<[2], [2], [1], [1], [0, 0, 0, 1, 1, 1], [0], [0]>} : vector<4x8x8xbf16>, vector<4x8x8xbf16>, vector<4x8x8xf32> -> vector<4x8x8xf32>
    "tpu.trace_stop"() : () -> ()
    %32 = vector.shape_cast %8 : vector<8x8xf32> to vector<1x8x8xf32>
    %33 = vector.broadcast %32 : vector<1x8x8xf32> to vector<4x8x8xf32>
    %34 = arith.addf %31, %33 : vector<4x8x8xf32>
    %cst_29 = arith.constant 0.176776692 : f32
    %35 = vector.broadcast %cst_29 : f32 to vector<4x8x8xf32>
    %36 = arith.mulf %34, %35 : vector<4x8x8xf32>
    %cst_30 = arith.constant dense<0xFF800000> : vector<4x8xf32>
    %37 = vector.multi_reduction <maximumf>, %36, %cst_30 [2] : vector<4x8x8xf32> to vector<4x8xf32>
    %38 = vector.shape_cast %37 : vector<4x8xf32> to vector<4x8x1xf32>
    %39 = vector.broadcast %38 : vector<4x8x1xf32> to vector<4x8x8xf32>
    %40 = arith.subf %36, %39 : vector<4x8x8xf32>
    %41 = math.exp %40 : vector<4x8x8xf32>
    %cst_31 = arith.constant dense<0.000000e+00> : vector<4x8xf32>
    %42 = vector.multi_reduction <add>, %41, %cst_31 [2] : vector<4x8x8xf32> to vector<4x8xf32>
    %43 = vector.shape_cast %42 : vector<4x8xf32> to vector<4x8x1xf32>
    %44 = tpu.reciprocal %43 {approx = true} : vector<4x8x1xf32> -> vector<4x8x1xf32>
    %45 = vector.broadcast %44 : vector<4x8x1xf32> to vector<4x8x8xf32>
    %46 = arith.mulf %41, %45 : vector<4x8x8xf32>
    %47 = arith.truncf %46 : vector<4x8x8xf32> to vector<4x8x8xbf16>
    %48 = arith.truncf %28 : vector<4x8x8xf32> to vector<4x8x8xbf16>
    "tpu.trace_start"() <{level = 10 : i32, message = "hqk,hkd->hqd"}> : () -> ()
    %cst_32 = arith.constant dense<0.000000e+00> : vector<4x8x8xf32>
    %49 = tpu.matmul %47, %48, %cst_32 {dimension_numbers = #tpu.dot_dimension_numbers<[2], [1], [1], [2], [0, 0, 0, 1, 1, 2], [0], [0]>} : vector<4x8x8xbf16>, vector<4x8x8xbf16>, vector<4x8x8xf32> -> vector<4x8x8xf32>
    "tpu.trace_stop"() : () -> ()
    %50 = arith.truncf %49 : vector<4x8x8xf32> to vector<4x8x8xbf16>
    "tpu.trace_start"() <{level = 10 : i32, message = "hqd,hde->hqe"}> : () -> ()
    %cst_33 = arith.constant dense<0.000000e+00> : vector<4x8x32xf32>
    %51 = tpu.matmul %50, %16, %cst_33 {dimension_numbers = #tpu.dot_dimension_numbers<[2], [1], [1], [2], [0, 0, 0, 1, 1, 2], [0], [0]>} : vector<4x8x8xbf16>, vector<4x8x32xbf16>, vector<4x8x32xf32> -> vector<4x8x32xf32>
    "tpu.trace_stop"() : () -> ()
    %52 = vector.extract_strided_slice %51 {offsets = [0, 0, 0], sizes = [1, 8, 32], strides = [1, 1, 1]} : vector<4x8x32xf32> to vector<1x8x32xf32>
    %53 = vector.shape_cast %52 : vector<1x8x32xf32> to vector<8x32xf32>
    %54 = vector.extract_strided_slice %51 {offsets = [1, 0, 0], sizes = [1, 8, 32], strides = [1, 1, 1]} : vector<4x8x32xf32> to vector<1x8x32xf32>
    %55 = vector.shape_cast %54 : vector<1x8x32xf32> to vector<8x32xf32>
    %56 = arith.addf %53, %55 : vector<8x32xf32>
    %57 = vector.extract_strided_slice %51 {offsets = [2, 0, 0], sizes = [1, 8, 32], strides = [1, 1, 1]} : vector<4x8x32xf32> to vector<1x8x32xf32>
    %58 = vector.shape_cast %57 : vector<1x8x32xf32> to vector<8x32xf32>
    %59 = arith.addf %56, %58 : vector<8x32xf32>
    %60 = vector.extract_strided_slice %51 {offsets = [3, 0, 0], sizes = [1, 8, 32], strides = [1, 1, 1]} : vector<4x8x32xf32> to vector<1x8x32xf32>
    %61 = vector.shape_cast %60 : vector<1x8x32xf32> to vector<8x32xf32>
    %62 = arith.addf %59, %61 : vector<8x32xf32>
    %63 = vector.broadcast %17 : vector<1x32xf32> to vector<8x32xf32>
    %64 = arith.addf %62, %63 : vector<8x32xf32>
    %65 = vector.extract_strided_slice %7 {offsets = [1, 0], sizes = [1, 32], strides = [1, 1]} : vector<9x32xf32> to vector<1x32xf32>
    %66 = vector.extract_strided_slice %7 {offsets = [2, 0], sizes = [1, 32], strides = [1, 1]} : vector<9x32xf32> to vector<1x32xf32>
    %67 = arith.addf %64, %3 : vector<8x32xf32>
    %cst_34 = arith.constant dense<0.000000e+00> : vector<8xf32>
    %68 = vector.multi_reduction <add>, %67, %cst_34 [1] : vector<8x32xf32> to vector<8xf32>
    %69 = vector.shape_cast %68 : vector<8xf32> to vector<8x1xf32>
    %cst_35 = arith.constant 3.200000e+01 : f32
    %70 = vector.broadcast %cst_35 : f32 to vector<8x1xf32>
    %71 = arith.divf %69, %70 : vector<8x1xf32>
    %72 = vector.broadcast %71 : vector<8x1xf32> to vector<8x32xf32>
    %73 = arith.subf %67, %72 : vector<8x32xf32>
    %74 = arith.mulf %73, %73 : vector<8x32xf32>
    %cst_36 = arith.constant dense<0.000000e+00> : vector<8xf32>
    %75 = vector.multi_reduction <add>, %74, %cst_36 [1] : vector<8x32xf32> to vector<8xf32>
    %76 = vector.shape_cast %75 : vector<8xf32> to vector<8x1xf32>
    %cst_37 = arith.constant 3.200000e+01 : f32
    %77 = vector.broadcast %cst_37 : f32 to vector<8x1xf32>
    %78 = arith.divf %76, %77 : vector<8x1xf32>
    %79 = vector.broadcast %71 : vector<8x1xf32> to vector<8x32xf32>
    %80 = arith.subf %67, %79 : vector<8x32xf32>
    %cst_38 = arith.constant 9.99999974E-6 : f32
    %81 = vector.broadcast %cst_38 : f32 to vector<8x1xf32>
    %82 = arith.addf %78, %81 : vector<8x1xf32>
    %83 = math.rsqrt %82 : vector<8x1xf32>
    %84 = vector.broadcast %83 : vector<8x1xf32> to vector<8x32xf32>
    %85 = arith.mulf %80, %84 : vector<8x32xf32>
    %86 = vector.broadcast %65 : vector<1x32xf32> to vector<8x32xf32>
    %87 = arith.mulf %85, %86 : vector<8x32xf32>
    %88 = vector.broadcast %66 : vector<1x32xf32> to vector<8x32xf32>
    %89 = arith.addf %87, %88 : vector<8x32xf32>
    %c0_39 = arith.constant 0 : index
    %c0_40 = arith.constant 0 : index
    %90 = vector.load %arg5[%c0_39, %c0_40] : memref<8x8xf32, #tpu.memory_space<vmem>>, vector<8x8xf32>
    %c0_41 = arith.constant 0 : index
    %c0_42 = arith.constant 0 : index
    %c0_43 = arith.constant 0 : index
    %c0_44 = arith.constant 0 : index
    %91 = vector.load %arg10[%c0_41, %c0_42, %c0_43, %c0_44] : memref<1x4x32x8xbf16, #tpu.memory_space<vmem>>, vector<1x4x32x8xbf16>
    %92 = vector.shape_cast %91 : vector<1x4x32x8xbf16> to vector<4x32x8xbf16>
    %c0_45 = arith.constant 0 : index
    %c0_46 = arith.constant 0 : index
    %c0_47 = arith.constant 0 : index
    %c0_48 = arith.constant 0 : index
    %93 = vector.load %arg11[%c0_45, %c0_46, %c0_47, %c0_48] : memref<1x4x32x8xbf16, #tpu.memory_space<vmem>>, vector<1x4x32x8xbf16>
    %94 = vector.shape_cast %93 : vector<1x4x32x8xbf16> to vector<4x32x8xbf16>
    %c0_49 = arith.constant 0 : index
    %c0_50 = arith.constant 0 : index
    %c0_51 = arith.constant 0 : index
    %c0_52 = arith.constant 0 : index
    %95 = vector.load %arg12[%c0_49, %c0_50, %c0_51, %c0_52] : memref<1x4x32x8xbf16, #tpu.memory_space<vmem>>, vector<1x4x32x8xbf16>
    %96 = vector.shape_cast %95 : vector<1x4x32x8xbf16> to vector<4x32x8xbf16>
    %c0_53 = arith.constant 0 : index
    %c0_54 = arith.constant 0 : index
    %c0_55 = arith.constant 0 : index
    %c0_56 = arith.constant 0 : index
    %97 = vector.load %arg13[%c0_53, %c0_54, %c0_55, %c0_56] : memref<1x4x8x32xbf16, #tpu.memory_space<vmem>>, vector<1x4x8x32xbf16>
    %98 = vector.shape_cast %97 : vector<1x4x8x32xbf16> to vector<4x8x32xbf16>
    %99 = vector.extract_strided_slice %7 {offsets = [3, 0], sizes = [1, 32], strides = [1, 1]} : vector<9x32xf32> to vector<1x32xf32>
    %100 = arith.truncf %89 : vector<8x32xf32> to vector<8x32xbf16>
    %101 = vector.shape_cast %100 : vector<8x32xbf16> to vector<1x8x32xbf16>
    %102 = vector.shape_cast %101 : vector<1x8x32xbf16> to vector<1x8x32xbf16>
    %103 = vector.broadcast %102 : vector<1x8x32xbf16> to vector<4x8x32xbf16>
    %104 = vector.shape_cast %5 : vector<8x32xbf16> to vector<1x8x32xbf16>
    %105 = vector.shape_cast %104 : vector<1x8x32xbf16> to vector<1x8x32xbf16>
    %106 = vector.broadcast %105 : vector<1x8x32xbf16> to vector<4x8x32xbf16>
    "tpu.trace_start"() <{level = 10 : i32, message = "hqe,hed->hqd"}> : () -> ()
    %cst_57 = arith.constant dense<0.000000e+00> : vector<4x8x8xf32>
    %107 = tpu.matmul %103, %92, %cst_57 {dimension_numbers = #tpu.dot_dimension_numbers<[2], [1], [1], [2], [0, 0, 0, 1, 1, 2], [0], [0]>} : vector<4x8x32xbf16>, vector<4x32x8xbf16>, vector<4x8x8xf32> -> vector<4x8x8xf32>
    "tpu.trace_stop"() : () -> ()
    "tpu.trace_start"() <{level = 10 : i32, message = "hke,hed->hkd"}> : () -> ()
    %cst_58 = arith.constant dense<0.000000e+00> : vector<4x8x8xf32>
    %108 = tpu.matmul %106, %94, %cst_58 {dimension_numbers = #tpu.dot_dimension_numbers<[2], [1], [1], [2], [0, 0, 0, 1, 1, 2], [0], [0]>} : vector<4x8x32xbf16>, vector<4x32x8xbf16>, vector<4x8x8xf32> -> vector<4x8x8xf32>
    %cst_59 = arith.constant dense<0.000000e+00> : vector<4x8x8xf32>
    %109 = tpu.matmul %106, %96, %cst_59 {dimension_numbers = #tpu.dot_dimension_numbers<[2], [1], [1], [2], [0, 0, 0, 1, 1, 2], [0], [0]>} : vector<4x8x32xbf16>, vector<4x32x8xbf16>, vector<4x8x8xf32> -> vector<4x8x8xf32>
    "tpu.trace_stop"() : () -> ()
    %110 = arith.truncf %107 : vector<4x8x8xf32> to vector<4x8x8xbf16>
    %111 = arith.truncf %108 : vector<4x8x8xf32> to vector<4x8x8xbf16>
    "tpu.trace_start"() <{level = 10 : i32, message = "hqd,hkd->hqk"}> : () -> ()
    %cst_60 = arith.constant dense<0.000000e+00> : vector<4x8x8xf32>
    %112 = tpu.matmul %110, %111, %cst_60 {dimension_numbers = #tpu.dot_dimension_numbers<[2], [2], [1], [1], [0, 0, 0, 1, 1, 1], [0], [0]>} : vector<4x8x8xbf16>, vector<4x8x8xbf16>, vector<4x8x8xf32> -> vector<4x8x8xf32>
    "tpu.trace_stop"() : () -> ()
    %113 = vector.shape_cast %90 : vector<8x8xf32> to vector<1x8x8xf32>
    %114 = vector.broadcast %113 : vector<1x8x8xf32> to vector<4x8x8xf32>
    %115 = arith.addf %112, %114 : vector<4x8x8xf32>
    %cst_61 = arith.constant 0.176776692 : f32
    %116 = vector.broadcast %cst_61 : f32 to vector<4x8x8xf32>
    %117 = arith.mulf %115, %116 : vector<4x8x8xf32>
    %cst_62 = arith.constant dense<0xFF800000> : vector<4x8xf32>
    %118 = vector.multi_reduction <maximumf>, %117, %cst_62 [2] : vector<4x8x8xf32> to vector<4x8xf32>
    %119 = vector.shape_cast %118 : vector<4x8xf32> to vector<4x8x1xf32>
    %120 = vector.broadcast %119 : vector<4x8x1xf32> to vector<4x8x8xf32>
    %121 = arith.subf %117, %120 : vector<4x8x8xf32>
    %122 = math.exp %121 : vector<4x8x8xf32>
    %cst_63 = arith.constant dense<0.000000e+00> : vector<4x8xf32>
    %123 = vector.multi_reduction <add>, %122, %cst_63 [2] : vector<4x8x8xf32> to vector<4x8xf32>
    %124 = vector.shape_cast %123 : vector<4x8xf32> to vector<4x8x1xf32>
    %125 = tpu.reciprocal %124 {approx = true} : vector<4x8x1xf32> -> vector<4x8x1xf32>
    %126 = vector.broadcast %125 : vector<4x8x1xf32> to vector<4x8x8xf32>
    %127 = arith.mulf %122, %126 : vector<4x8x8xf32>
    %128 = arith.truncf %127 : vector<4x8x8xf32> to vector<4x8x8xbf16>
    %129 = arith.truncf %109 : vector<4x8x8xf32> to vector<4x8x8xbf16>
    "tpu.trace_start"() <{level = 10 : i32, message = "hqk,hkd->hqd"}> : () -> ()
    %cst_64 = arith.constant dense<0.000000e+00> : vector<4x8x8xf32>
    %130 = tpu.matmul %128, %129, %cst_64 {dimension_numbers = #tpu.dot_dimension_numbers<[2], [1], [1], [2], [0, 0, 0, 1, 1, 2], [0], [0]>} : vector<4x8x8xbf16>, vector<4x8x8xbf16>, vector<4x8x8xf32> -> vector<4x8x8xf32>
    "tpu.trace_stop"() : () -> ()
    %131 = arith.truncf %130 : vector<4x8x8xf32> to vector<4x8x8xbf16>
    "tpu.trace_start"() <{level = 10 : i32, message = "hqd,hde->hqe"}> : () -> ()
    %cst_65 = arith.constant dense<0.000000e+00> : vector<4x8x32xf32>
    %132 = tpu.matmul %131, %98, %cst_65 {dimension_numbers = #tpu.dot_dimension_numbers<[2], [1], [1], [2], [0, 0, 0, 1, 1, 2], [0], [0]>} : vector<4x8x8xbf16>, vector<4x8x32xbf16>, vector<4x8x32xf32> -> vector<4x8x32xf32>
    "tpu.trace_stop"() : () -> ()
    %133 = vector.extract_strided_slice %132 {offsets = [0, 0, 0], sizes = [1, 8, 32], strides = [1, 1, 1]} : vector<4x8x32xf32> to vector<1x8x32xf32>
    %134 = vector.shape_cast %133 : vector<1x8x32xf32> to vector<8x32xf32>
    %135 = vector.extract_strided_slice %132 {offsets = [1, 0, 0], sizes = [1, 8, 32], strides = [1, 1, 1]} : vector<4x8x32xf32> to vector<1x8x32xf32>
    %136 = vector.shape_cast %135 : vector<1x8x32xf32> to vector<8x32xf32>
    %137 = arith.addf %134, %136 : vector<8x32xf32>
    %138 = vector.extract_strided_slice %132 {offsets = [2, 0, 0], sizes = [1, 8, 32], strides = [1, 1, 1]} : vector<4x8x32xf32> to vector<1x8x32xf32>
    %139 = vector.shape_cast %138 : vector<1x8x32xf32> to vector<8x32xf32>
    %140 = arith.addf %137, %139 : vector<8x32xf32>
    %141 = vector.extract_strided_slice %132 {offsets = [3, 0, 0], sizes = [1, 8, 32], strides = [1, 1, 1]} : vector<4x8x32xf32> to vector<1x8x32xf32>
    %142 = vector.shape_cast %141 : vector<1x8x32xf32> to vector<8x32xf32>
    %143 = arith.addf %140, %142 : vector<8x32xf32>
    %144 = vector.broadcast %99 : vector<1x32xf32> to vector<8x32xf32>
    %145 = arith.addf %143, %144 : vector<8x32xf32>
    %146 = vector.extract_strided_slice %7 {offsets = [4, 0], sizes = [1, 32], strides = [1, 1]} : vector<9x32xf32> to vector<1x32xf32>
    %147 = vector.extract_strided_slice %7 {offsets = [5, 0], sizes = [1, 32], strides = [1, 1]} : vector<9x32xf32> to vector<1x32xf32>
    %148 = arith.addf %145, %89 : vector<8x32xf32>
    %cst_66 = arith.constant dense<0.000000e+00> : vector<8xf32>
    %149 = vector.multi_reduction <add>, %148, %cst_66 [1] : vector<8x32xf32> to vector<8xf32>
    %150 = vector.shape_cast %149 : vector<8xf32> to vector<8x1xf32>
    %cst_67 = arith.constant 3.200000e+01 : f32
    %151 = vector.broadcast %cst_67 : f32 to vector<8x1xf32>
    %152 = arith.divf %150, %151 : vector<8x1xf32>
    %153 = vector.broadcast %152 : vector<8x1xf32> to vector<8x32xf32>
    %154 = arith.subf %148, %153 : vector<8x32xf32>
    %155 = arith.mulf %154, %154 : vector<8x32xf32>
    %cst_68 = arith.constant dense<0.000000e+00> : vector<8xf32>
    %156 = vector.multi_reduction <add>, %155, %cst_68 [1] : vector<8x32xf32> to vector<8xf32>
    %157 = vector.shape_cast %156 : vector<8xf32> to vector<8x1xf32>
    %cst_69 = arith.constant 3.200000e+01 : f32
    %158 = vector.broadcast %cst_69 : f32 to vector<8x1xf32>
    %159 = arith.divf %157, %158 : vector<8x1xf32>
    %160 = vector.broadcast %152 : vector<8x1xf32> to vector<8x32xf32>
    %161 = arith.subf %148, %160 : vector<8x32xf32>
    %cst_70 = arith.constant 9.99999974E-6 : f32
    %162 = vector.broadcast %cst_70 : f32 to vector<8x1xf32>
    %163 = arith.addf %159, %162 : vector<8x1xf32>
    %164 = math.rsqrt %163 : vector<8x1xf32>
    %165 = vector.broadcast %164 : vector<8x1xf32> to vector<8x32xf32>
    %166 = arith.mulf %161, %165 : vector<8x32xf32>
    %167 = vector.broadcast %146 : vector<1x32xf32> to vector<8x32xf32>
    %168 = arith.mulf %166, %167 : vector<8x32xf32>
    %169 = vector.broadcast %147 : vector<1x32xf32> to vector<8x32xf32>
    %170 = arith.addf %168, %169 : vector<8x32xf32>
    %171 = arith.truncf %170 : vector<8x32xf32> to vector<8x32xbf16>
    %c0_71 = arith.constant 0 : index
    %c0_72 = arith.constant 0 : index
    %c0_73 = arith.constant 0 : index
    %172 = vector.load %arg14[%c0_71, %c0_72, %c0_73] : memref<1x32x64xbf16, #tpu.memory_space<vmem>>, vector<1x32x64xbf16>
    %173 = vector.shape_cast %172 : vector<1x32x64xbf16> to vector<32x64xbf16>
    %cst_74 = arith.constant dense<0.000000e+00> : vector<8x64xf32>
    %174 = tpu.matmul %171, %173, %cst_74 {dimension_numbers = #tpu.dot_dimension_numbers<[1], [0], [0], [1], [0, 0, 1, 1], [], []>} : vector<8x32xbf16>, vector<32x64xbf16>, vector<8x64xf32> -> vector<8x64xf32>
    %c0_75 = arith.constant 0 : index
    %c0_76 = arith.constant 0 : index
    %c0_77 = arith.constant 0 : index
    %175 = vector.load %arg16[%c0_75, %c0_76, %c0_77] : memref<1x1x64xf32, #tpu.memory_space<vmem>>, vector<1x1x64xf32>
    %176 = vector.shape_cast %175 : vector<1x1x64xf32> to vector<1x64xf32>
    %177 = vector.broadcast %176 : vector<1x64xf32> to vector<8x64xf32>
    %178 = arith.addf %174, %177 : vector<8x64xf32>
    %cst_78 = arith.constant 0.000000e+00 : f32
    %179 = vector.broadcast %cst_78 : f32 to vector<8x64xf32>
    %180 = arith.maximumf %178, %179 : vector<8x64xf32>
    %181 = arith.truncf %180 : vector<8x64xf32> to vector<8x64xbf16>
    %c0_79 = arith.constant 0 : index
    %c0_80 = arith.constant 0 : index
    %c0_81 = arith.constant 0 : index
    %182 = vector.load %arg15[%c0_79, %c0_80, %c0_81] : memref<1x64x32xbf16, #tpu.memory_space<vmem>>, vector<1x64x32xbf16>
    %183 = vector.shape_cast %182 : vector<1x64x32xbf16> to vector<64x32xbf16>
    %cst_82 = arith.constant dense<0.000000e+00> : vector<8x32xf32>
    %184 = tpu.matmul %181, %183, %cst_82 {dimension_numbers = #tpu.dot_dimension_numbers<[1], [0], [0], [1], [0, 0, 1, 1], [], []>} : vector<8x64xbf16>, vector<64x32xbf16>, vector<8x32xf32> -> vector<8x32xf32>
    %185 = vector.extract_strided_slice %7 {offsets = [6, 0], sizes = [1, 32], strides = [1, 1]} : vector<9x32xf32> to vector<1x32xf32>
    %186 = vector.broadcast %185 : vector<1x32xf32> to vector<8x32xf32>
    %187 = arith.addf %184, %186 : vector<8x32xf32>
    %188 = vector.extract_strided_slice %7 {offsets = [7, 0], sizes = [1, 32], strides = [1, 1]} : vector<9x32xf32> to vector<1x32xf32>
    %189 = vector.extract_strided_slice %7 {offsets = [8, 0], sizes = [1, 32], strides = [1, 1]} : vector<9x32xf32> to vector<1x32xf32>
    %190 = arith.addf %187, %170 : vector<8x32xf32>
    %cst_83 = arith.constant dense<0.000000e+00> : vector<8xf32>
    %191 = vector.multi_reduction <add>, %190, %cst_83 [1] : vector<8x32xf32> to vector<8xf32>
    %192 = vector.shape_cast %191 : vector<8xf32> to vector<8x1xf32>
    %cst_84 = arith.constant 3.200000e+01 : f32
    %193 = vector.broadcast %cst_84 : f32 to vector<8x1xf32>
    %194 = arith.divf %192, %193 : vector<8x1xf32>
    %195 = vector.broadcast %194 : vector<8x1xf32> to vector<8x32xf32>
    %196 = arith.subf %190, %195 : vector<8x32xf32>
    %197 = arith.mulf %196, %196 : vector<8x32xf32>
    %cst_85 = arith.constant dense<0.000000e+00> : vector<8xf32>
    %198 = vector.multi_reduction <add>, %197, %cst_85 [1] : vector<8x32xf32> to vector<8xf32>
    %199 = vector.shape_cast %198 : vector<8xf32> to vector<8x1xf32>
    %cst_86 = arith.constant 3.200000e+01 : f32
    %200 = vector.broadcast %cst_86 : f32 to vector<8x1xf32>
    %201 = arith.divf %199, %200 : vector<8x1xf32>
    %202 = vector.broadcast %194 : vector<8x1xf32> to vector<8x32xf32>
    %203 = arith.subf %190, %202 : vector<8x32xf32>
    %cst_87 = arith.constant 9.99999974E-6 : f32
    %204 = vector.broadcast %cst_87 : f32 to vector<8x1xf32>
    %205 = arith.addf %201, %204 : vector<8x1xf32>
    %206 = math.rsqrt %205 : vector<8x1xf32>
    %207 = vector.broadcast %206 : vector<8x1xf32> to vector<8x32xf32>
    %208 = arith.mulf %203, %207 : vector<8x32xf32>
    %209 = vector.broadcast %188 : vector<1x32xf32> to vector<8x32xf32>
    %210 = arith.mulf %208, %209 : vector<8x32xf32>
    %211 = vector.broadcast %189 : vector<1x32xf32> to vector<8x32xf32>
    %212 = arith.addf %210, %211 : vector<8x32xf32>
    %c0_88 = arith.constant 0 : index
    %c0_89 = arith.constant 0 : index
    %213 = vector.load %arg19[%c0_88, %c0_89] : memref<8x32xf32, #tpu.memory_space<vmem>>, vector<8x32xf32>
    tpu.vector_store %arg19[%c0_88, %c0_89], %212 {strides = array<i32>} : memref<8x32xf32, #tpu.memory_space<vmem>>, vector<8x32xf32>,
    %c1_i32 = arith.constant 1 : i32
    %214 = arith.cmpi eq, %arg1, %c1_i32 : i32
    %215 = arith.extui %214 : i1 to i32
    %c0_i32_90 = arith.constant 0 : i32
    %216 = arith.cmpi ne, %215, %c0_i32_90 : i32
    scf.if %216 {
      %c0_91 = arith.constant 0 : index
      %c0_92 = arith.constant 0 : index
      %c0_93 = arith.constant 0 : index
      %217 = vector.load %arg18[%c0_91, %c0_92, %c0_93] : memref<1x8x32xf32, #tpu.memory_space<vmem>>, vector<1x8x32xf32>
      %218 = vector.shape_cast %217 : vector<1x8x32xf32> to vector<8x32xf32>
      %219 = vector.shape_cast %212 : vector<8x32xf32> to vector<1x8x32xf32>
      tpu.vector_store %arg18[%c0_91, %c0_92, %c0_93], %219 {strides = array<i32>} : memref<1x8x32xf32, #tpu.memory_space<vmem>>, vector<1x8x32xf32>,
    } else {
    }
    return
  }
  func.func @transform_0(%arg0: i32, %arg1: i32) -> (i32, i32, i32) {
    %c0_i32 = arith.constant 0 : i32
    %c0_i32_0 = arith.constant 0 : i32
    %c0_i32_1 = arith.constant 0 : i32
    return %arg0, %c0_i32, %c0_i32_0 : i32, i32, i32
  }
  func.func @transform_1(%arg0: i32, %arg1: i32) -> (i32, i32, i32) {
    %c0_i32 = arith.constant 0 : i32
    %c0_i32_0 = arith.constant 0 : i32
    %c0_i32_1 = arith.constant 0 : i32
    return %arg0, %c0_i32, %c0_i32_0 : i32, i32, i32
  }
  func.func @transform_2(%arg0: i32, %arg1: i32) -> (i32, i32) {
    %c0_i32 = arith.constant 0 : i32
    %c0_i32_0 = arith.constant 0 : i32
    %c0_i32_1 = arith.constant 0 : i32
    return %c0_i32, %c0_i32_0 : i32, i32
  }
  func.func @transform_3(%arg0: i32, %arg1: i32) -> (i32, i32) {
    %c0_i32 = arith.constant 0 : i32
    %c0_i32_0 = arith.constant 0 : i32
    %c0_i32_1 = arith.constant 0 : i32
    return %c0_i32, %c0_i32_0 : i32, i32
  }
  func.func @transform_4(%arg0: i32, %arg1: i32) -> (i32, i32, i32, i32) {
    %c0_i32 = arith.constant 0 : i32
    %c0_i32_0 = arith.constant 0 : i32
    %c0_i32_1 = arith.constant 0 : i32
    %c0_i32_2 = arith.constant 0 : i32
    return %arg1, %c0_i32, %c0_i32_0, %c0_i32_1 : i32, i32, i32, i32
  }
  func.func @transform_5(%arg0: i32, %arg1: i32) -> (i32, i32, i32, i32) {
    %c0_i32 = arith.constant 0 : i32
    %c0_i32_0 = arith.constant 0 : i32
    %c0_i32_1 = arith.constant 0 : i32
    %c0_i32_2 = arith.constant 0 : i32
    return %arg1, %c0_i32, %c0_i32_0, %c0_i32_1 : i32, i32, i32, i32
  }
  func.func @transform_6(%arg0: i32, %arg1: i32) -> (i32, i32, i32, i32) {
    %c0_i32 = arith.constant 0 : i32
    %c0_i32_0 = arith.constant 0 : i32
    %c0_i32_1 = arith.constant 0 : i32
    %c0_i32_2 = arith.constant 0 : i32
    return %arg1, %c0_i32, %c0_i32_0, %c0_i32_1 : i32, i32, i32, i32
  }
  func.func @transform_7(%arg0: i32, %arg1: i32) -> (i32, i32, i32, i32) {
    %c0_i32 = arith.constant 0 : i32
    %c0_i32_0 = arith.constant 0 : i32
    %c0_i32_1 = arith.constant 0 : i32
    %c0_i32_2 = arith.constant 0 : i32
    return %arg1, %c0_i32, %c0_i32_0, %c0_i32_1 : i32, i32, i32, i32
  }
  func.func @transform_8(%arg0: i32, %arg1: i32) -> (i32, i32, i32, i32) {
    %c0_i32 = arith.constant 0 : i32
    %c0_i32_0 = arith.constant 0 : i32
    %c0_i32_1 = arith.constant 0 : i32
    %c0_i32_2 = arith.constant 0 : i32
    return %arg1, %c0_i32, %c0_i32_0, %c0_i32_1 : i32, i32, i32, i32
  }
  func.func @transform_9(%arg0: i32, %arg1: i32) -> (i32, i32, i32, i32) {
    %c0_i32 = arith.constant 0 : i32
    %c0_i32_0 = arith.constant 0 : i32
    %c0_i32_1 = arith.constant 0 : i32
    %c0_i32_2 = arith.constant 0 : i32
    return %arg1, %c0_i32, %c0_i32_0, %c0_i32_1 : i32, i32, i32, i32
  }
  func.func @transform_10(%arg0: i32, %arg1: i32) -> (i32, i32, i32, i32) {
    %c0_i32 = arith.constant 0 : i32
    %c0_i32_0 = arith.constant 0 : i32
    %c0_i32_1 = arith.constant 0 : i32
    %c0_i32_2 = arith.constant 0 : i32
    return %arg1, %c0_i32, %c0_i32_0, %c0_i32_1 : i32, i32, i32, i32
  }
  func.func @transform_11(%arg0: i32, %arg1: i32) -> (i32, i32, i32, i32) {
    %c0_i32 = arith.constant 0 : i32
    %c0_i32_0 = arith.constant 0 : i32
    %c0_i32_1 = arith.constant 0 : i32
    %c0_i32_2 = arith.constant 0 : i32
    return %arg1, %c0_i32, %c0_i32_0, %c0_i32_1 : i32, i32, i32, i32
  }
  func.func @transform_12(%arg0: i32, %arg1: i32) -> (i32, i32, i32) {
    %c0_i32 = arith.constant 0 : i32
    %c0_i32_0 = arith.constant 0 : i32
    %c0_i32_1 = arith.constant 0 : i32
    return %arg1, %c0_i32, %c0_i32_0 : i32, i32, i32
  }
  func.func @transform_13(%arg0: i32, %arg1: i32) -> (i32, i32, i32) {
    %c0_i32 = arith.constant 0 : i32
    %c0_i32_0 = arith.constant 0 : i32
    %c0_i32_1 = arith.constant 0 : i32
    return %arg1, %c0_i32, %c0_i32_0 : i32, i32, i32
  }
  func.func @transform_14(%arg0: i32, %arg1: i32) -> (i32, i32, i32) {
    %c0_i32 = arith.constant 0 : i32
    %c0_i32_0 = arith.constant 0 : i32
    %c0_i32_1 = arith.constant 0 : i32
    return %arg1, %c0_i32, %c0_i32_0 : i32, i32, i32
  }
  func.func @transform_15(%arg0: i32, %arg1: i32) -> (i32, i32, i32) {
    %c0_i32 = arith.constant 0 : i32
    %c0_i32_0 = arith.constant 0 : i32
    %c0_i32_1 = arith.constant 0 : i32
    return %arg1, %c0_i32, %c0_i32_0 : i32, i32, i32
  }
  func.func @transform_16(%arg0: i32, %arg1: i32) -> (i32, i32, i32) {
    %c0_i32 = arith.constant 0 : i32
    %c0_i32_0 = arith.constant 0 : i32
    %c0_i32_1 = arith.constant 0 : i32
    return %arg0, %c0_i32, %c0_i32_0 : i32, i32, i32
  }
}

</mosaic_0001>

<llo_original>
// kernel: decoder_forward.3
$region0: #{decoder_forward.3}
  #allocation0 [shape = 'u32[]', space=smem, size = 0x4, offset = 0x4, fixed_abs, tag = 'smem constant byte address 0x4 - core index']
  #allocation1 [shape = 'u32[72,128]{1,0:T(1,128)}', space=vmem, size = 0x9000, scoped, tag = 'internal scratch']
  %s0 = inlined_call_operand.vmem [shape: bf16[16,32], index: 0, kind: input, shape index: {}]
  %s1 = inlined_call_operand.vmem [shape: bf16[32,128], index: 1, kind: input, shape index: {}]
  %s2 = inlined_call_operand.vmem [shape: f32[1,128], index: 2, kind: input, shape index: {}]
  %s3 = inlined_call_operand.vmem [shape: f32[16,128], index: 3, kind: output, shape index: {}]
  %s4 = sld [smem:[#allocation0]]
  $region22: #{decoder_forward.3} parent=0
    _
  %s6 = ssub.s32 1, %s4
  %s7 = scalar_select 0, %s6, %s4
  // Predicated region
  $region2: #{decoder_forward.3} parent=0 // pred_check
    _
  $region3: #{decoder_forward.3} parent=0 // pred_check_branch
    %9 = sbr.rel (0) target = $region5
  $region4: #{decoder_forward.3} parent=0 // pred_region
    _
  $region5: #{decoder_forward.3} parent=0 // pred_fallthru
    _
  // Predicated region
  $region6: #{decoder_forward.3} parent=0 // pred_check
    _
  $region7: #{decoder_forward.3} parent=0 // pred_check_branch
    %11 = sbr.rel (0) target = $region9
  $region8: #{decoder_forward.3} parent=0 // pred_region
    _
  $region9: #{decoder_forward.3} parent=0 // pred_fallthru
    _
  // Predicated region
  $region10: #{decoder_forward.3} parent=0 // pred_check
    _
  $region11: #{decoder_forward.3} parent=0 // pred_check_branch
    %13 = sbr.rel (0) target = $region13
  $region12: #{decoder_forward.3} parent=0 // pred_region
    _
  $region13: #{decoder_forward.3} parent=0 // pred_fallthru
    _
  %v15 = vld [vmem:[%s0] sm:$0xf]
  %v16 = vld [vmem:[%s0 + $0x4] sm:$0xf]
  %v17 = vld [vmem:[%s1] sm:$0xf]
  %v18 = vld [vmem:[%s1 + $0x4] sm:$0xf]
  %v19 = vld [vmem:[%s1 + $0x8] sm:$0xf]
  %v20 = vld [vmem:[%s1 + $0xc] sm:$0xf]
  %v21 = vld [vmem:[%s2] sm:$0x1]
  %v23 = vperm.slane %v21, 0
  %v27 = vunpack.c.l.b16 %v15
  %v28 = vunpack.c.l.b16 %v16
  %v29 = vpack.c.b16 %v28, %v27
  %v34 = vunpack.c.l.b16 %v17
  %v35 = vunpack.c.l.b16 %v18
  %v36 = vunpack.c.l.b16 %v19
  %v37 = vunpack.c.l.b16 %v20
  %v38 = vpack.c.b16 %v35, %v34
  %v39 = vpack.c.b16 %v37, %v36
  %vm42 = vcmask 261120
  %v44 = vsel %vm42, %v29, 0
  %46 = vmatpush.bf16.msra.mxu0 0
  %47 = vmatpush.bf16.msra.mxu0 0
  %48 = vmatpush.bf16.msra.mxu0 0
  %49 = vmatpush.bf16.msra.mxu0 0
  %50 = vmatpush.bf16.msra.mxu0 0
  %51 = vmatpush.bf16.msra.mxu0 0
  %52 = vmatpush.bf16.msra.mxu0 %v39
  %53 = vmatpush.bf16.msra.mxu0 %v38
  %54 = vmatmul.bf16.gmra.mxu0 %v44
  %v55 = vpop.f32.mrf.mxu0
  %v56 = vadd.f32 %v23, %v55
  %v57 = vpop.f32.mrf.mxu0
  %v58 = vadd.f32 %v23, %v57
  %59 = vdwg.mxu0
  %60 = vst [vmem:[%s3] sm:$0xff] %v56
  %61 = vst [vmem:[%s3 + $0x8] sm:$0xff] %v58
  // Predicated region
  $region14: #{decoder_forward.3} parent=0 // pred_check
    _
  $region15: #{decoder_forward.3} parent=0 // pred_check_branch
    %63 = sbr.rel (0) target = $region17
  $region16: #{decoder_forward.3} parent=0 // pred_region
    _
  $region17: #{decoder_forward.3} parent=0 // pred_fallthru
    _
  // Predicated region
  $region18: #{decoder_forward.3} parent=0 // pred_check
    _
  $region19: #{decoder_forward.3} parent=0 // pred_check_branch
    %65 = sbr.rel (0) target = $region21
  $region20: #{decoder_forward.3} parent=0 // pred_region
    _
  $region21: #{decoder_forward.3} parent=0 // pred_fallthru
    _

// kernel: decoder_forward.2
$region0: #{decoder_forward.2}
  #allocation0 [shape = 'u32[]', space=smem, size = 0x4, offset = 0x4, fixed_abs, tag = 'smem constant byte address 0x4 - core index']
  #allocation1 [shape = 'u32[72,128]{1,0:T(1,128)}', space=vmem, size = 0x9000, scoped, tag = 'internal scratch']
  #allocation2 [shape = 'f32[8,32]{1,0:T(8,128)}', space=vmem, size = 0x1000, scoped, tag = 'scratch operand']
  %s0 = inlined_call_operand.vmem [shape: f32[2,8,32], index: 0, kind: input, shape index: {}]
  %s1 = inlined_call_operand.vmem [shape: bf16[2,8,32], index: 1, kind: input, shape index: {}]
  %s2 = inlined_call_operand.vmem [shape: f32[8,8], index: 2, kind: input, shape index: {}]
  %s3 = inlined_call_operand.vmem [shape: f32[8,8], index: 3, kind: input, shape index: {}]
  %s4 = inlined_call_operand.vmem [shape: bf16[2,4,32,8], index: 4, kind: input, shape index: {}]
  %s5 = inlined_call_operand.vmem [shape: bf16[2,4,32,8], index: 5, kind: input, shape index: {}]
  %s6 = inlined_call_operand.vmem [shape: bf16[2,4,32,8], index: 6, kind: input, shape index: {}]
  %s7 = inlined_call_operand.vmem [shape: bf16[2,4,8,32], index: 7, kind: input, shape index: {}]
  %s8 = inlined_call_operand.vmem [shape: bf16[2,4,32,8], index: 8, kind: input, shape index: {}]
  %s9 = inlined_call_operand.vmem [shape: bf16[2,4,32,8], index: 9, kind: input, shape index: {}]
  %s10 = inlined_call_operand.vmem [shape: bf16[2,4,32,8], index: 10, kind: input, shape index: {}]
  %s11 = inlined_call_operand.vmem [shape: bf16[2,4,8,32], index: 11, kind: input, shape index: {}]
  %s12 = inlined_call_operand.vmem [shape: bf16[2,32,64], index: 12, kind: input, shape index: {}]
  %s13 = inlined_call_operand.vmem [shape: bf16[2,64,32], index: 13, kind: input, shape index: {}]
  %s14 = inlined_call_operand.vmem [shape: f32[2,1,64], index: 14, kind: input, shape index: {}]
  %s15 = inlined_call_operand.vmem [shape: f32[2,9,32], index: 15, kind: input, shape index: {}]
  %s16 = inlined_call_operand.vmem [shape: f32[2,8,32], index: 16, kind: output, shape index: {}]
  %s17 = sld [smem:[#allocation0]]
  $region105: #{decoder_forward.2} parent=0
    _
  %s19 = ssub.s32 1, %s17
  %s20 = scalar_select 0, %s19, %s17
  loop: start=0, step=1, limit=6
  $region2: #{decoder_forward.2} parent=0 // loop_pre_header
    _
  $region3: #{decoder_forward.2} parent=0 // loop_header
    %s22 = sphi 0, %s26
    %p23 = scmp.ge.s32.totalorder %s22, 6
    %s29 = sphi 0, %s41
    %s30 = sphi 0, %s37
    %s31 = sphi 0, %s29
    %s32 = sphi 0, %s30
    %s33 = sphi 0, %s31
    %s34 = sphi 0, %s32
    %s44 = sphi 0, %s46
    %s47 = sphi 0, %s44
    %s48 = sphi 0, %s47
    %s64 = sphi 0, %s48
    %s70 = sphi 0, %s72
    %s73 = sphi 0, %s70
    %s74 = sphi 0, %s73
    %s90 = sphi 0, %s74
    %s94 = sphi 0, %s94
    %s96 = sphi 0, %s94
    %s97 = sphi 0, %s96
    %s111 = sphi 0, %s97
    %s115 = sphi 0, %s115
    %s117 = sphi 0, %s115
    %s118 = sphi 0, %s117
    %s132 = sphi 0, %s118
    %s138 = sphi 0, %s140
    %s141 = sphi 0, %s138
    %s142 = sphi 0, %s141
    %s158 = sphi 0, %s142
    %s164 = sphi 0, %s166
    %s167 = sphi 0, %s164
    %s168 = sphi 0, %s167
    %s184 = sphi 0, %s168
    %s190 = sphi 0, %s192
    %s193 = sphi 0, %s190
    %s194 = sphi 0, %s193
    %s210 = sphi 0, %s194
    %s216 = sphi 0, %s218
    %s219 = sphi 0, %s216
    %s220 = sphi 0, %s219
    %s236 = sphi 0, %s220
    %s242 = sphi 0, %s244
    %s245 = sphi 0, %s242
    %s246 = sphi 0, %s245
    %s262 = sphi 0, %s246
    %s268 = sphi 0, %s270
    %s271 = sphi 0, %s268
    %s272 = sphi 0, %s271
    %s288 = sphi 0, %s272
    %s294 = sphi 0, %s296
    %s297 = sphi 0, %s294
    %s298 = sphi 0, %s297
    %s314 = sphi 0, %s298
    %s320 = sphi 0, %s322
    %s323 = sphi 0, %s320
    %s324 = sphi 0, %s323
    %s340 = sphi 0, %s324
    %s346 = sphi 0, %s348
    %s349 = sphi 0, %s346
    %s350 = sphi 0, %s349
    %s366 = sphi 0, %s350
    %s372 = sphi 0, %s374
    %s375 = sphi 0, %s372
    %s376 = sphi 0, %s375
    %s392 = sphi 0, %s376
    %s398 = sphi 0, %s400
    %s401 = sphi 0, %s398
    %s402 = sphi 0, %s401
    %s418 = sphi 0, %s402
    %s424 = sphi 0, %s426
    %s427 = sphi 0, %s424
    %s428 = sphi 0, %s427
    %s444 = sphi 0, %s428
    %s450 = sphi 0, %s452
    %s453 = sphi 0, %s450
    %s454 = sphi 0, %s453
    %s470 = sphi 0, %s454
  $region4: #{decoder_forward.2} parent=0 // loop_header_branch
    %25 = sbr.rel (%p23) target = $region8
  $region5: #{decoder_forward.2} parent=0 // loop_body
    %s27 = ssub.s32 %s22, 1
    %s28 = ssub.s32 %s22, 2
    %s35 = sadd.s32 1, %s30
    %p36 = scmp.ge.s32.totalorder %s35, 2
    %s37 = scalar_select %p36, 0, %s35
    %s38 = sadd.s32 1, %s29
    %s39 = scalar_select %p36, %s38, %s29
    %p40 = scmp.ge.s32.totalorder %s39, 2
    %s41 = scalar_select %p40, 0, %s39
    %s42 = ssub.s32 %s29, %s41
    %p43 = scmp.eq.s32.totalorder %s42, 0
    %s45 = sadd.s32 %s44, 1
    %s46 = scalar_select %p43, %s44, %s45
    %p49 = pneg %p43
    %p50 = scmp.eq.s32.totalorder %s22, 3
    %p51 = por %p49, %p50
    %p52 = scmp.ne.s32.totalorder %s44, %s47
    %p53 = scmp.eq.s32.totalorder %s22, 0
    %p54 = por %p52, %p53
    %p55 = scmp.ne.s32.totalorder %s44, %s47
    %p56 = scmp.eq.s32.totalorder %s27, 3
    %p57 = por %p55, %p56
    %p58 = scmp.ne.s32.totalorder %s47, %s48
    %p59 = scmp.eq.s32.totalorder %s27, 0
    %p60 = por %p58, %p59
    %p61 = scmp.ne.s32.totalorder %s47, %s48
    %p62 = scmp.eq.s32.totalorder %s28, 3
    %p63 = por %p61, %p62
    %p65 = scmp.ne.s32.totalorder %s48, %s64
    %p66 = scmp.eq.s32.totalorder %s28, 0
    %p67 = por %p65, %p66
    %s68 = ssub.s32 %s29, %s41
    %p69 = scmp.eq.s32.totalorder %s68, 0
    %s71 = sadd.s32 %s70, 1
    %s72 = scalar_select %p69, %s70, %s71
    %p75 = pneg %p69
    %p76 = scmp.eq.s32.totalorder %s22, 3
    %p77 = por %p75, %p76
    %p78 = scmp.ne.s32.totalorder %s70, %s73
    %p79 = scmp.eq.s32.totalorder %s22, 0
    %p80 = por %p78, %p79
    %p81 = scmp.ne.s32.totalorder %s70, %s73
    %p82 = scmp.eq.s32.totalorder %s27, 3
    %p83 = por %p81, %p82
    %p84 = scmp.ne.s32.totalorder %s73, %s74
    %p85 = scmp.eq.s32.totalorder %s27, 0
    %p86 = por %p84, %p85
    %p87 = scmp.ne.s32.totalorder %s73, %s74
    %p88 = scmp.eq.s32.totalorder %s28, 3
    %p89 = por %p87, %p88
    %p91 = scmp.ne.s32.totalorder %s74, %s90
    %p92 = scmp.eq.s32.totalorder %s28, 0
    %p93 = por %p91, %p92
    %s95 = sadd.s32 %s94, 1
    %p98 = scmp.eq.s32.totalorder %s22, 3
    %p99 = scmp.ne.s32.totalorder %s94, %s96
    %p100 = scmp.eq.s32.totalorder %s22, 0
    %p101 = por %p99, %p100
    %p102 = scmp.ne.s32.totalorder %s94, %s96
    %p103 = scmp.eq.s32.totalorder %s27, 3
    %p104 = por %p102, %p103
    %p105 = scmp.ne.s32.totalorder %s96, %s97
    %p106 = scmp.eq.s32.totalorder %s27, 0
    %p107 = por %p105, %p106
    %p108 = scmp.ne.s32.totalorder %s96, %s97
    %p109 = scmp.eq.s32.totalorder %s28, 3
    %p110 = por %p108, %p109
    %p112 = scmp.ne.s32.totalorder %s97, %s111
    %p113 = scmp.eq.s32.totalorder %s28, 0
    %p114 = por %p112, %p113
    %s116 = sadd.s32 %s115, 1
    %p119 = scmp.eq.s32.totalorder %s22, 3
    %p120 = scmp.ne.s32.totalorder %s115, %s117
    %p121 = scmp.eq.s32.totalorder %s22, 0
    %p122 = por %p120, %p121
    %p123 = scmp.ne.s32.totalorder %s115, %s117
    %p124 = scmp.eq.s32.totalorder %s27, 3
    %p125 = por %p123, %p124
    %p126 = scmp.ne.s32.totalorder %s117, %s118
    %p127 = scmp.eq.s32.totalorder %s27, 0
    %p128 = por %p126, %p127
    %p129 = scmp.ne.s32.totalorder %s117, %s118
    %p130 = scmp.eq.s32.totalorder %s28, 3
    %p131 = por %p129, %p130
    %p133 = scmp.ne.s32.totalorder %s118, %s132
    %p134 = scmp.eq.s32.totalorder %s28, 0
    %p135 = por %p133, %p134
    %s136 = ssub.s32 %s30, %s37
    %p137 = scmp.eq.s32.totalorder %s136, 0
    %s139 = sadd.s32 %s138, 1
    %s140 = scalar_select %p137, %s138, %s139
    %p143 = pneg %p137
    %p144 = scmp.eq.s32.totalorder %s22, 3
    %p145 = por %p143, %p144
    %p146 = scmp.ne.s32.totalorder %s138, %s141
    %p147 = scmp.eq.s32.totalorder %s22, 0
    %p148 = por %p146, %p147
    %p149 = scmp.ne.s32.totalorder %s138, %s141
    %p150 = scmp.eq.s32.totalorder %s27, 3
    %p151 = por %p149, %p150
    %p152 = scmp.ne.s32.totalorder %s141, %s142
    %p153 = scmp.eq.s32.totalorder %s27, 0
    %p154 = por %p152, %p153
    %p155 = scmp.ne.s32.totalorder %s141, %s142
    %p156 = scmp.eq.s32.totalorder %s28, 3
    %p157 = por %p155, %p156
    %p159 = scmp.ne.s32.totalorder %s142, %s158
    %p160 = scmp.eq.s32.totalorder %s28, 0
    %p161 = por %p159, %p160
    %s162 = ssub.s32 %s30, %s37
    %p163 = scmp.eq.s32.totalorder %s162, 0
    %s165 = sadd.s32 %s164, 1
    %s166 = scalar_select %p163, %s164, %s165
    %p169 = pneg %p163
    %p170 = scmp.eq.s32.totalorder %s22, 3
    %p171 = por %p169, %p170
    %p172 = scmp.ne.s32.totalorder %s164, %s167
    %p173 = scmp.eq.s32.totalorder %s22, 0
    %p174 = por %p172, %p173
    %p175 = scmp.ne.s32.totalorder %s164, %s167
    %p176 = scmp.eq.s32.totalorder %s27, 3
    %p177 = por %p175, %p176
    %p178 = scmp.ne.s32.totalorder %s167, %s168
    %p179 = scmp.eq.s32.totalorder %s27, 0
    %p180 = por %p178, %p179
    %p181 = scmp.ne.s32.totalorder %s167, %s168
    %p182 = scmp.eq.s32.totalorder %s28, 3
    %p183 = por %p181, %p182
    %p185 = scmp.ne.s32.totalorder %s168, %s184
    %p186 = scmp.eq.s32.totalorder %s28, 0
    %p187 = por %p185, %p186
    %s188 = ssub.s32 %s30, %s37
    %p189 = scmp.eq.s32.totalorder %s188, 0
    %s191 = sadd.s32 %s190, 1
    %s192 = scalar_select %p189, %s190, %s191
    %p195 = pneg %p189
    %p196 = scmp.eq.s32.totalorder %s22, 3
    %p197 = por %p195, %p196
    %p198 = scmp.ne.s32.totalorder %s190, %s193
    %p199 = scmp.eq.s32.totalorder %s22, 0
    %p200 = por %p198, %p199
    %p201 = scmp.ne.s32.totalorder %s190, %s193
    %p202 = scmp.eq.s32.totalorder %s27, 3
    %p203 = por %p201, %p202
    %p204 = scmp.ne.s32.totalorder %s193, %s194
    %p205 = scmp.eq.s32.totalorder %s27, 0
    %p206 = por %p204, %p205
    %p207 = scmp.ne.s32.totalorder %s193, %s194
    %p208 = scmp.eq.s32.totalorder %s28, 3
    %p209 = por %p207, %p208
    %p211 = scmp.ne.s32.totalorder %s194, %s210
    %p212 = scmp.eq.s32.totalorder %s28, 0
    %p213 = por %p211, %p212
    %s214 = ssub.s32 %s30, %s37
    %p215 = scmp.eq.s32.totalorder %s214, 0
    %s217 = sadd.s32 %s216, 1
    %s218 = scalar_select %p215, %s216, %s217
    %p221 = pneg %p215
    %p222 = scmp.eq.s32.totalorder %s22, 3
    %p223 = por %p221, %p222
    %p224 = scmp.ne.s32.totalorder %s216, %s219
    %p225 = scmp.eq.s32.totalorder %s22, 0
    %p226 = por %p224, %p225
    %p227 = scmp.ne.s32.totalorder %s216, %s219
    %p228 = scmp.eq.s32.totalorder %s27, 3
    %p229 = por %p227, %p228
    %p230 = scmp.ne.s32.totalorder %s219, %s220
    %p231 = scmp.eq.s32.totalorder %s27, 0
    %p232 = por %p230, %p231
    %p233 = scmp.ne.s32.totalorder %s219, %s220
    %p234 = scmp.eq.s32.totalorder %s28, 3
    %p235 = por %p233, %p234
    %p237 = scmp.ne.s32.totalorder %s220, %s236
    %p238 = scmp.eq.s32.totalorder %s28, 0
    %p239 = por %p237, %p238
    %s240 = ssub.s32 %s30, %s37
    %p241 = scmp.eq.s32.totalorder %s240, 0
    %s243 = sadd.s32 %s242, 1
    %s244 = scalar_select %p241, %s242, %s243
    %p247 = pneg %p241
    %p248 = scmp.eq.s32.totalorder %s22, 3
    %p249 = por %p247, %p248
    %p250 = scmp.ne.s32.totalorder %s242, %s245
    %p251 = scmp.eq.s32.totalorder %s22, 0
    %p252 = por %p250, %p251
    %p253 = scmp.ne.s32.totalorder %s242, %s245
    %p254 = scmp.eq.s32.totalorder %s27, 3
    %p255 = por %p253, %p254
    %p256 = scmp.ne.s32.totalorder %s245, %s246
    %p257 = scmp.eq.s32.totalorder %s27, 0
    %p258 = por %p256, %p257
    %p259 = scmp.ne.s32.totalorder %s245, %s246
    %p260 = scmp.eq.s32.totalorder %s28, 3
    %p261 = por %p259, %p260
    %p263 = scmp.ne.s32.totalorder %s246, %s262
    %p264 = scmp.eq.s32.totalorder %s28, 0
    %p265 = por %p263, %p264
    %s266 = ssub.s32 %s30, %s37
    %p267 = scmp.eq.s32.totalorder %s266, 0
    %s269 = sadd.s32 %s268, 1
    %s270 = scalar_select %p267, %s268, %s269
    %p273 = pneg %p267
    %p274 = scmp.eq.s32.totalorder %s22, 3
    %p275 = por %p273, %p274
    %p276 = scmp.ne.s32.totalorder %s268, %s271
    %p277 = scmp.eq.s32.totalorder %s22, 0
    %p278 = por %p276, %p277
    %p279 = scmp.ne.s32.totalorder %s268, %s271
    %p280 = scmp.eq.s32.totalorder %s27, 3
    %p281 = por %p279, %p280
    %p282 = scmp.ne.s32.totalorder %s271, %s272
    %p283 = scmp.eq.s32.totalorder %s27, 0
    %p284 = por %p282, %p283
    %p285 = scmp.ne.s32.totalorder %s271, %s272
    %p286 = scmp.eq.s32.totalorder %s28, 3
    %p287 = por %p285, %p286
    %p289 = scmp.ne.s32.totalorder %s272, %s288
    %p290 = scmp.eq.s32.totalorder %s28, 0
    %p291 = por %p289, %p290
    %s292 = ssub.s32 %s30, %s37
    %p293 = scmp.eq.s32.totalorder %s292, 0
    %s295 = sadd.s32 %s294, 1
    %s296 = scalar_select %p293, %s294, %s295
    %p299 = pneg %p293
    %p300 = scmp.eq.s32.totalorder %s22, 3
    %p301 = por %p299, %p300
    %p302 = scmp.ne.s32.totalorder %s294, %s297
    %p303 = scmp.eq.s32.totalorder %s22, 0
    %p304 = por %p302, %p303
    %p305 = scmp.ne.s32.totalorder %s294, %s297
    %p306 = scmp.eq.s32.totalorder %s27, 3
    %p307 = por %p305, %p306
    %p308 = scmp.ne.s32.totalorder %s297, %s298
    %p309 = scmp.eq.s32.totalorder %s27, 0
    %p310 = por %p308, %p309
    %p311 = scmp.ne.s32.totalorder %s297, %s298
    %p312 = scmp.eq.s32.totalorder %s28, 3
    %p313 = por %p311, %p312
    %p315 = scmp.ne.s32.totalorder %s298, %s314
    %p316 = scmp.eq.s32.totalorder %s28, 0
    %p317 = por %p315, %p316
    %s318 = ssub.s32 %s30, %s37
    %p319 = scmp.eq.s32.totalorder %s318, 0
    %s321 = sadd.s32 %s320, 1
    %s322 = scalar_select %p319, %s320, %s321
    %p325 = pneg %p319
    %p326 = scmp.eq.s32.totalorder %s22, 3
    %p327 = por %p325, %p326
    %p328 = scmp.ne.s32.totalorder %s320, %s323
    %p329 = scmp.eq.s32.totalorder %s22, 0
    %p330 = por %p328, %p329
    %p331 = scmp.ne.s32.totalorder %s320, %s323
    %p332 = scmp.eq.s32.totalorder %s27, 3
    %p333 = por %p331, %p332
    %p334 = scmp.ne.s32.totalorder %s323, %s324
    %p335 = scmp.eq.s32.totalorder %s27, 0
    %p336 = por %p334, %p335
    %p337 = scmp.ne.s32.totalorder %s323, %s324
    %p338 = scmp.eq.s32.totalorder %s28, 3
    %p339 = por %p337, %p338
    %p341 = scmp.ne.s32.totalorder %s324, %s340
    %p342 = scmp.eq.s32.totalorder %s28, 0
    %p343 = por %p341, %p342
    %s344 = ssub.s32 %s30, %s37
    %p345 = scmp.eq.s32.totalorder %s344, 0
    %s347 = sadd.s32 %s346, 1
    %s348 = scalar_select %p345, %s346, %s347
    %p351 = pneg %p345
    %p352 = scmp.eq.s32.totalorder %s22, 3
    %p353 = por %p351, %p352
    %p354 = scmp.ne.s32.totalorder %s346, %s349
    %p355 = scmp.eq.s32.totalorder %s22, 0
    %p356 = por %p354, %p355
    %p357 = scmp.ne.s32.totalorder %s346, %s349
    %p358 = scmp.eq.s32.totalorder %s27, 3
    %p359 = por %p357, %p358
    %p360 = scmp.ne.s32.totalorder %s349, %s350
    %p361 = scmp.eq.s32.totalorder %s27, 0
    %p362 = por %p360, %p361
    %p363 = scmp.ne.s32.totalorder %s349, %s350
    %p364 = scmp.eq.s32.totalorder %s28, 3
    %p365 = por %p363, %p364
    %p367 = scmp.ne.s32.totalorder %s350, %s366
    %p368 = scmp.eq.s32.totalorder %s28, 0
    %p369 = por %p367, %p368
    %s370 = ssub.s32 %s30, %s37
    %p371 = scmp.eq.s32.totalorder %s370, 0
    %s373 = sadd.s32 %s372, 1
    %s374 = scalar_select %p371, %s372, %s373
    %p377 = pneg %p371
    %p378 = scmp.eq.s32.totalorder %s22, 3
    %p379 = por %p377, %p378
    %p380 = scmp.ne.s32.totalorder %s372, %s375
    %p381 = scmp.eq.s32.totalorder %s22, 0
    %p382 = por %p380, %p381
    %p383 = scmp.ne.s32.totalorder %s372, %s375
    %p384 = scmp.eq.s32.totalorder %s27, 3
    %p385 = por %p383, %p384
    %p386 = scmp.ne.s32.totalorder %s375, %s376
    %p387 = scmp.eq.s32.totalorder %s27, 0
    %p388 = por %p386, %p387
    %p389 = scmp.ne.s32.totalorder %s375, %s376
    %p390 = scmp.eq.s32.totalorder %s28, 3
    %p391 = por %p389, %p390
    %p393 = scmp.ne.s32.totalorder %s376, %s392
    %p394 = scmp.eq.s32.totalorder %s28, 0
    %p395 = por %p393, %p394
    %s396 = ssub.s32 %s30, %s37
    %p397 = scmp.eq.s32.totalorder %s396, 0
    %s399 = sadd.s32 %s398, 1
    %s400 = scalar_select %p397, %s398, %s399
    %p403 = pneg %p397
    %p404 = scmp.eq.s32.totalorder %s22, 3
    %p405 = por %p403, %p404
    %p406 = scmp.ne.s32.totalorder %s398, %s401
    %p407 = scmp.eq.s32.totalorder %s22, 0
    %p408 = por %p406, %p407
    %p409 = scmp.ne.s32.totalorder %s398, %s401
    %p410 = scmp.eq.s32.totalorder %s27, 3
    %p411 = por %p409, %p410
    %p412 = scmp.ne.s32.totalorder %s401, %s402
    %p413 = scmp.eq.s32.totalorder %s27, 0
    %p414 = por %p412, %p413
    %p415 = scmp.ne.s32.totalorder %s401, %s402
    %p416 = scmp.eq.s32.totalorder %s28, 3
    %p417 = por %p415, %p416
    %p419 = scmp.ne.s32.totalorder %s402, %s418
    %p420 = scmp.eq.s32.totalorder %s28, 0
    %p421 = por %p419, %p420
    %s422 = ssub.s32 %s30, %s37
    %p423 = scmp.eq.s32.totalorder %s422, 0
    %s425 = sadd.s32 %s424, 1
    %s426 = scalar_select %p423, %s424, %s425
    %p429 = pneg %p423
    %p430 = scmp.eq.s32.totalorder %s22, 3
    %p431 = por %p429, %p430
    %p432 = scmp.ne.s32.totalorder %s424, %s427
    %p433 = scmp.eq.s32.totalorder %s22, 0
    %p434 = por %p432, %p433
    %p435 = scmp.ne.s32.totalorder %s424, %s427
    %p436 = scmp.eq.s32.totalorder %s27, 3
    %p437 = por %p435, %p436
    %p438 = scmp.ne.s32.totalorder %s427, %s428
    %p439 = scmp.eq.s32.totalorder %s27, 0
    %p440 = por %p438, %p439
    %p441 = scmp.ne.s32.totalorder %s427, %s428
    %p442 = scmp.eq.s32.totalorder %s28, 3
    %p443 = por %p441, %p442
    %p445 = scmp.ne.s32.totalorder %s428, %s444
    %p446 = scmp.eq.s32.totalorder %s28, 0
    %p447 = por %p445, %p446
    %s448 = ssub.s32 %s29, %s41
    %p449 = scmp.eq.s32.totalorder %s448, 0
    %s451 = sadd.s32 %s450, 1
    %s452 = scalar_select %p449, %s450, %s451
    %p455 = pneg %p449
    %p456 = scmp.eq.s32.totalorder %s22, 3
    %p457 = por %p455, %p456
    %p458 = scmp.ne.s32.totalorder %s450, %s453
    %p459 = scmp.eq.s32.totalorder %s22, 0
    %p460 = por %p458, %p459
    %p461 = scmp.ne.s32.totalorder %s450, %s453
    %p462 = scmp.eq.s32.totalorder %s27, 3
    %p463 = por %p461, %p462
    %p464 = scmp.ne.s32.totalorder %s453, %s454
    %p465 = scmp.eq.s32.totalorder %s27, 0
    %p466 = por %p464, %p465
    %p467 = scmp.ne.s32.totalorder %s453, %s454
    %p468 = scmp.eq.s32.totalorder %s28, 3
    %p469 = por %p467, %p468
    %p471 = scmp.ne.s32.totalorder %s454, %s470
    %p472 = scmp.eq.s32.totalorder %s28, 0
    %p473 = por %p471, %p472
    %p474 = scmp.le.s32.totalorder 1, %s22
    %p475 = scmp.lt.s32.totalorder %s22, 5
    %p476 = pnand %p474, %p475
    %p477 = pneg %p476
    // Predicated region
    $region9: #{decoder_forward.2} parent=5 // pred_check
      _
    $region10: #{decoder_forward.2} parent=5 // pred_check_branch
      %479 = sbr.rel (%p476) target = $region12
    $region11: #{decoder_forward.2} parent=5 // pred_region
      %s480 = ssub.s32 %s22, 1
      // Predicated region
      $region13: #{decoder_forward.2} parent=11 // pred_check
        %p481 = pneg %p107
      $region14: #{decoder_forward.2} parent=11 // pred_check_branch
        %483 = sbr.rel (%p481) target = $region16
      $region15: #{decoder_forward.2} parent=11 // pred_region
        _
      $region16: #{decoder_forward.2} parent=11 // pred_fallthru
        _
      // Predicated region
      $region17: #{decoder_forward.2} parent=11 // pred_check
        %p484 = pneg %p128
      $region18: #{decoder_forward.2} parent=11 // pred_check_branch
        %486 = sbr.rel (%p484) target = $region20
      $region19: #{decoder_forward.2} parent=11 // pred_region
        _
      $region20: #{decoder_forward.2} parent=11 // pred_fallthru
        _
    $region12: #{decoder_forward.2} parent=5 // pred_fallthru
      _
    %p487 = scmp.lt.s32.totalorder %s22, 4
    // Predicated region
    $region21: #{decoder_forward.2} parent=5 // pred_check
      %p488 = pneg %p487
    $region22: #{decoder_forward.2} parent=5 // pred_check_branch
      %490 = sbr.rel (%p488) target = $region24
    $region23: #{decoder_forward.2} parent=5 // pred_region
      // Predicated region
      $region25: #{decoder_forward.2} parent=23 // pred_check
        %p491 = pneg %p54
      $region26: #{decoder_forward.2} parent=23 // pred_check_branch
        %493 = sbr.rel (%p491) target = $region28
      $region27: #{decoder_forward.2} parent=23 // pred_region
        %p494 = scmp.lt.s32.totalorder %s29, 1
        %s495 = scalar_select %p494, %s29, 1
        %s496 = smul.addr %s495, 8
        %s497 = scalar_lea.vmem %s0, %s496
      $region28: #{decoder_forward.2} parent=23 // pred_fallthru
        _
      // Predicated region
      $region29: #{decoder_forward.2} parent=23 // pred_check
        %p498 = pneg %p80
      $region30: #{decoder_forward.2} parent=23 // pred_check_branch
        %500 = sbr.rel (%p498) target = $region32
      $region31: #{decoder_forward.2} parent=23 // pred_region
        %p501 = scmp.lt.s32.totalorder %s29, 1
        %s502 = scalar_select %p501, %s29, 1
        %s503 = smul.addr %s502, 4
        %s504 = scalar_lea.vmem %s1, %s503
      $region32: #{decoder_forward.2} parent=23 // pred_fallthru
        _
      // Predicated region
      $region33: #{decoder_forward.2} parent=23 // pred_check
        %p505 = pneg %p148
      $region34: #{decoder_forward.2} parent=23 // pred_check_branch
        %507 = sbr.rel (%p505) target = $region36
      $region35: #{decoder_forward.2} parent=23 // pred_region
        %p508 = scmp.lt.s32.totalorder %s30, 1
        %s509 = scalar_select %p508, %s30, 1
        %s510 = smul.addr %s509, 16
        %s511 = smul.addr %s510, 4
        %s512 = scalar_lea.vmem %s4, %s511
      $region36: #{decoder_forward.2} parent=23 // pred_fallthru
        _
      // Predicated region
      $region37: #{decoder_forward.2} parent=23 // pred_check
        %p513 = pneg %p174
      $region38: #{decoder_forward.2} parent=23 // pred_check_branch
        %515 = sbr.rel (%p513) target = $region40
      $region39: #{decoder_forward.2} parent=23 // pred_region
        %p516 = scmp.lt.s32.totalorder %s30, 1
        %s517 = scalar_select %p516, %s30, 1
        %s518 = smul.addr %s517, 16
        %s519 = smul.addr %s518, 4
        %s520 = scalar_lea.vmem %s5, %s519
      $region40: #{decoder_forward.2} parent=23 // pred_fallthru
        _
      // Predicated region
      $region41: #{decoder_forward.2} parent=23 // pred_check
        %p521 = pneg %p200
      $region42: #{decoder_forward.2} parent=23 // pred_check_branch
        %523 = sbr.rel (%p521) target = $region44
      $region43: #{decoder_forward.2} parent=23 // pred_region
        %p524 = scmp.lt.s32.totalorder %s30, 1
        %s525 = scalar_select %p524, %s30, 1
        %s526 = smul.addr %s525, 16
        %s527 = smul.addr %s526, 4
        %s528 = scalar_lea.vmem %s6, %s527
      $region44: #{decoder_forward.2} parent=23 // pred_fallthru
        _
      // Predicated region
      $region45: #{decoder_forward.2} parent=23 // pred_check
        %p529 = pneg %p226
      $region46: #{decoder_forward.2} parent=23 // pred_check_branch
        %531 = sbr.rel (%p529) target = $region48
      $region47: #{decoder_forward.2} parent=23 // pred_region
        %p532 = scmp.lt.s32.totalorder %s30, 1
        %s533 = scalar_select %p532, %s30, 1
        %s534 = smul.addr %s533, 4
        %s535 = smul.addr %s534, 4
        %s536 = scalar_lea.vmem %s7, %s535
      $region48: #{decoder_forward.2} parent=23 // pred_fallthru
        _
      // Predicated region
      $region49: #{decoder_forward.2} parent=23 // pred_check
        %p537 = pneg %p252
      $region50: #{decoder_forward.2} parent=23 // pred_check_branch
        %539 = sbr.rel (%p537) target = $region52
      $region51: #{decoder_forward.2} parent=23 // pred_region
        %p540 = scmp.lt.s32.totalorder %s30, 1
        %s541 = scalar_select %p540, %s30, 1
        %s542 = smul.addr %s541, 16
        %s543 = smul.addr %s542, 4
        %s544 = scalar_lea.vmem %s8, %s543
      $region52: #{decoder_forward.2} parent=23 // pred_fallthru
        _
      // Predicated region
      $region53: #{decoder_forward.2} parent=23 // pred_check
        %p545 = pneg %p278
      $region54: #{decoder_forward.2} parent=23 // pred_check_branch
        %547 = sbr.rel (%p545) target = $region56
      $region55: #{decoder_forward.2} parent=23 // pred_region
        %p548 = scmp.lt.s32.totalorder %s30, 1
        %s549 = scalar_select %p548, %s30, 1
        %s550 = smul.addr %s549, 16
        %s551 = smul.addr %s550, 4
        %s552 = scalar_lea.vmem %s9, %s551
      $region56: #{decoder_forward.2} parent=23 // pred_fallthru
        _
      // Predicated region
      $region57: #{decoder_forward.2} parent=23 // pred_check
        %p553 = pneg %p304
      $region58: #{decoder_forward.2} parent=23 // pred_check_branch
        %555 = sbr.rel (%p553) target = $region60
      $region59: #{decoder_forward.2} parent=23 // pred_region
        %p556 = scmp.lt.s32.totalorder %s30, 1
        %s557 = scalar_select %p556, %s30, 1
        %s558 = smul.addr %s557, 16
        %s559 = smul.addr %s558, 4
        %s560 = scalar_lea.vmem %s10, %s559
      $region60: #{decoder_forward.2} parent=23 // pred_fallthru
        _
      // Predicated region
      $region61: #{decoder_forward.2} parent=23 // pred_check
        %p561 = pneg %p330
      $region62: #{decoder_forward.2} parent=23 // pred_check_branch
        %563 = sbr.rel (%p561) target = $region64
      $region63: #{decoder_forward.2} parent=23 // pred_region
        %p564 = scmp.lt.s32.totalorder %s30, 1
        %s565 = scalar_select %p564, %s30, 1
        %s566 = smul.addr %s565, 4
        %s567 = smul.addr %s566, 4
        %s568 = scalar_lea.vmem %s11, %s567
      $region64: #{decoder_forward.2} parent=23 // pred_fallthru
        _
      // Predicated region
      $region65: #{decoder_forward.2} parent=23 // pred_check
        %p569 = pneg %p356
      $region66: #{decoder_forward.2} parent=23 // pred_check_branch
        %571 = sbr.rel (%p569) target = $region68
      $region67: #{decoder_forward.2} parent=23 // pred_region
        %p572 = scmp.lt.s32.totalorder %s30, 1
        %s573 = scalar_select %p572, %s30, 1
        %s574 = smul.addr %s573, 4
        %s575 = smul.addr %s574, 4
        %s576 = scalar_lea.vmem %s12, %s575
      $region68: #{decoder_forward.2} parent=23 // pred_fallthru
        _
      // Predicated region
      $region69: #{decoder_forward.2} parent=23 // pred_check
        %p577 = pneg %p382
      $region70: #{decoder_forward.2} parent=23 // pred_check_branch
        %579 = sbr.rel (%p577) target = $region72
      $region71: #{decoder_forward.2} parent=23 // pred_region
        %p580 = scmp.lt.s32.totalorder %s30, 1
        %s581 = scalar_select %p580, %s30, 1
        %s582 = smul.addr %s581, 8
        %s583 = smul.addr %s582, 4
        %s584 = scalar_lea.vmem %s13, %s583
      $region72: #{decoder_forward.2} parent=23 // pred_fallthru
        _
      // Predicated region
      $region73: #{decoder_forward.2} parent=23 // pred_check
        %p585 = pneg %p408
      $region74: #{decoder_forward.2} parent=23 // pred_check_branch
        %587 = sbr.rel (%p585) target = $region76
      $region75: #{decoder_forward.2} parent=23 // pred_region
        %p588 = scmp.lt.s32.totalorder %s30, 1
        %s589 = scalar_select %p588, %s30, 1
        %s590 = scalar_lea.vmem %s14, %s589
      $region76: #{decoder_forward.2} parent=23 // pred_fallthru
        _
      // Predicated region
      $region77: #{decoder_forward.2} parent=23 // pred_check
        %p591 = pneg %p434
      $region78: #{decoder_forward.2} parent=23 // pred_check_branch
        %593 = sbr.rel (%p591) target = $region80
      $region79: #{decoder_forward.2} parent=23 // pred_region
        %p594 = scmp.lt.s32.totalorder %s30, 1
        %s595 = scalar_select %p594, %s30, 1
        %s596 = smul.addr %s595, 2
        %s597 = smul.addr %s596, 8
        %s598 = scalar_lea.vmem %s15, %s597
      $region80: #{decoder_forward.2} parent=23 // pred_fallthru
        _
    $region24: #{decoder_forward.2} parent=5 // pred_fallthru
      _
    %p599 = scmp.le.s32.totalorder 1, %s22
    %p600 = scmp.lt.s32.totalorder %s22, 5
    %p601 = pnand %p599, %p600
    %p602 = pneg %p601
    // Predicated region
    $region81: #{decoder_forward.2} parent=5 // pred_check
      _
    $region82: #{decoder_forward.2} parent=5 // pred_check_branch
      %604 = sbr.rel (%p601) target = $region84
    $region83: #{decoder_forward.2} parent=5 // pred_region
      %s605 = ssub.s32 %s22, 1
      %p606 = scmp.lt.s32.totalorder %s31, 1
      %s607 = scalar_select %p606, %s31, 1
      %s608 = smul.addr %s607, 8
      %s609 = scalar_lea.vmem %s0, %s608
      %p610 = pneg %p60
      %p611 = pneg %p57
      %p612 = scmp.lt.s32.totalorder %s31, 1
      %s613 = scalar_select %p612, %s31, 1
      %s614 = smul.addr %s613, 4
      %s615 = scalar_lea.vmem %s1, %s614
      %p616 = pneg %p86
      %p617 = pneg %p83
      %p618 = pneg %p107
      %p619 = pneg %p104
      %p620 = pneg %p128
      %p621 = pneg %p125
      %p622 = scmp.lt.s32.totalorder %s32, 1
      %s623 = scalar_select %p622, %s32, 1
      %s624 = smul.addr %s623, 16
      %s625 = smul.addr %s624, 4
      %s626 = scalar_lea.vmem %s4, %s625
      %p627 = pneg %p154
      %p628 = pneg %p151
      %p629 = scmp.lt.s32.totalorder %s32, 1
      %s630 = scalar_select %p629, %s32, 1
      %s631 = smul.addr %s630, 16
      %s632 = smul.addr %s631, 4
      %s633 = scalar_lea.vmem %s5, %s632
      %p634 = pneg %p180
      %p635 = pneg %p177
      %p636 = scmp.lt.s32.totalorder %s32, 1
      %s637 = scalar_select %p636, %s32, 1
      %s638 = smul.addr %s637, 16
      %s639 = smul.addr %s638, 4
      %s640 = scalar_lea.vmem %s6, %s639
      %p641 = pneg %p206
      %p642 = pneg %p203
      %p643 = scmp.lt.s32.totalorder %s32, 1
      %s644 = scalar_select %p643, %s32, 1
      %s645 = smul.addr %s644, 4
      %s646 = smul.addr %s645, 4
      %s647 = scalar_lea.vmem %s7, %s646
      %p648 = pneg %p232
      %p649 = pneg %p229
      %p650 = scmp.lt.s32.totalorder %s32, 1
      %s651 = scalar_select %p650, %s32, 1
      %s652 = smul.addr %s651, 16
      %s653 = smul.addr %s652, 4
      %s654 = scalar_lea.vmem %s8, %s653
      %p655 = pneg %p258
      %p656 = pneg %p255
      %p657 = scmp.lt.s32.totalorder %s32, 1
      %s658 = scalar_select %p657, %s32, 1
      %s659 = smul.addr %s658, 16
      %s660 = smul.addr %s659, 4
      %s661 = scalar_lea.vmem %s9, %s660
      %p662 = pneg %p284
      %p663 = pneg %p281
      %p664 = scmp.lt.s32.totalorder %s32, 1
      %s665 = scalar_select %p664, %s32, 1
      %s666 = smul.addr %s665, 16
      %s667 = smul.addr %s666, 4
      %s668 = scalar_lea.vmem %s10, %s667
      %p669 = pneg %p310
      %p670 = pneg %p307
      %p671 = scmp.lt.s32.totalorder %s32, 1
      %s672 = scalar_select %p671, %s32, 1
      %s673 = smul.addr %s672, 4
      %s674 = smul.addr %s673, 4
      %s675 = scalar_lea.vmem %s11, %s674
      %p676 = pneg %p336
      %p677 = pneg %p333
      %p678 = scmp.lt.s32.totalorder %s32, 1
      %s679 = scalar_select %p678, %s32, 1
      %s680 = smul.addr %s679, 4
      %s681 = smul.addr %s680, 4
      %s682 = scalar_lea.vmem %s12, %s681
      %p683 = pneg %p362
      %p684 = pneg %p359
      %p685 = scmp.lt.s32.totalorder %s32, 1
      %s686 = scalar_select %p685, %s32, 1
      %s687 = smul.addr %s686, 8
      %s688 = smul.addr %s687, 4
      %s689 = scalar_lea.vmem %s13, %s688
      %p690 = pneg %p388
      %p691 = pneg %p385
      %p692 = scmp.lt.s32.totalorder %s32, 1
      %s693 = scalar_select %p692, %s32, 1
      %s694 = scalar_lea.vmem %s14, %s693
      %p695 = pneg %p414
      %p696 = pneg %p411
      %p697 = scmp.lt.s32.totalorder %s32, 1
      %s698 = scalar_select %p697, %s32, 1
      %s699 = smul.addr %s698, 2
      %s700 = smul.addr %s699, 8
      %s701 = scalar_lea.vmem %s15, %s700
      %p702 = pneg %p440
      %p703 = pneg %p437
      %p704 = pneg %p466
      %p705 = pneg %p463
      %p706 = scmp.lt.s32.totalorder %s31, 1
      %s707 = scalar_select %p706, %s31, 1
      %s708 = smul.addr %s707, 8
      %s709 = scalar_lea.vmem %s16, %s708
      %p710 = scmp.lt.s32.totalorder %s31, 1
      %s711 = scalar_select %p710, %s31, 1
      %s712 = smul.addr %s711, 8
      %s713 = scalar_lea.vmem %s0, %s712
      %p714 = scmp.lt.s32.totalorder %s31, 1
      %s715 = scalar_select %p714, %s31, 1
      %s716 = smul.addr %s715, 4
      %s717 = scalar_lea.vmem %s1, %s716
      %p718 = scmp.lt.s32.totalorder %s32, 1
      %s719 = scalar_select %p718, %s32, 1
      %s720 = smul.addr %s719, 16
      %s721 = smul.addr %s720, 4
      %s722 = scalar_lea.vmem %s4, %s721
      %p723 = scmp.lt.s32.totalorder %s32, 1
      %s724 = scalar_select %p723, %s32, 1
      %s725 = smul.addr %s724, 16
      %s726 = smul.addr %s725, 4
      %s727 = scalar_lea.vmem %s5, %s726
      %p728 = scmp.lt.s32.totalorder %s32, 1
      %s729 = scalar_select %p728, %s32, 1
      %s730 = smul.addr %s729, 16
      %s731 = smul.addr %s730, 4
      %s732 = scalar_lea.vmem %s6, %s731
      %p733 = scmp.lt.s32.totalorder %s32, 1
      %s734 = scalar_select %p733, %s32, 1
      %s735 = smul.addr %s734, 4
      %s736 = smul.addr %s735, 4
      %s737 = scalar_lea.vmem %s7, %s736
      %p738 = scmp.lt.s32.totalorder %s32, 1
      %s739 = scalar_select %p738, %s32, 1
      %s740 = smul.addr %s739, 16
      %s741 = smul.addr %s740, 4
      %s742 = scalar_lea.vmem %s8, %s741
      %p743 = scmp.lt.s32.totalorder %s32, 1
      %s744 = scalar_select %p743, %s32, 1
      %s745 = smul.addr %s744, 16
      %s746 = smul.addr %s745, 4
      %s747 = scalar_lea.vmem %s9, %s746
      %p748 = scmp.lt.s32.totalorder %s32, 1
      %s749 = scalar_select %p748, %s32, 1
      %s750 = smul.addr %s749, 16
      %s751 = smul.addr %s750, 4
      %s752 = scalar_lea.vmem %s10, %s751
      %p753 = scmp.lt.s32.totalorder %s32, 1
      %s754 = scalar_select %p753, %s32, 1
      %s755 = smul.addr %s754, 4
      %s756 = smul.addr %s755, 4
      %s757 = scalar_lea.vmem %s11, %s756
      %p758 = scmp.lt.s32.totalorder %s32, 1
      %s759 = scalar_select %p758, %s32, 1
      %s760 = smul.addr %s759, 4
      %s761 = smul.addr %s760, 4
      %s762 = scalar_lea.vmem %s12, %s761
      %p763 = scmp.lt.s32.totalorder %s32, 1
      %s764 = scalar_select %p763, %s32, 1
      %s765 = smul.addr %s764, 8
      %s766 = smul.addr %s765, 4
      %s767 = scalar_lea.vmem %s13, %s766
      %p768 = scmp.lt.s32.totalorder %s32, 1
      %s769 = scalar_select %p768, %s32, 1
      %s770 = scalar_lea.vmem %s14, %s769
      %p771 = scmp.lt.s32.totalorder %s32, 1
      %s772 = scalar_select %p771, %s32, 1
      %s773 = smul.addr %s772, 2
      %s774 = smul.addr %s773, 8
      %s775 = scalar_lea.vmem %s15, %s774
      %p776 = scmp.lt.s32.totalorder %s31, 1
      %s777 = scalar_select %p776, %s31, 1
      %s778 = smul.addr %s777, 8
      %s779 = scalar_lea.vmem %s16, %s778
      %p781 = scmp.eq.s32.totalorder %s32, 0
      // Predicated region
      $region85: #{decoder_forward.2} parent=83 // pred_check
        %p782 = pneg %p781
      $region86: #{decoder_forward.2} parent=83 // pred_check_branch
        %784 = sbr.rel (%p782) target = $region88
      $region87: #{decoder_forward.2} parent=83 // pred_region
        %v785 = vld [vmem:[%s713] sm:$0xff]
        %vm786 = vcmask 261120
        %787 = vst.msk [vmem:[#allocation2] sm:$0xff] %vm786, %v785
      $region88: #{decoder_forward.2} parent=83 // pred_fallthru
        _
      %v788 = vld [vmem:[#allocation2] sm:$0xff]
      %v789 = vld [vmem:[%s717] sm:$0xf]
      %v790 = vld [vmem:[%s775] sm:$0xff]
      %v791 = vld [vmem:[%s775 + $0x8] sm:$0x1]
      %v792 = vld [vmem:[%s2] sm:$0xff]
      %v793 = vld [vmem:[%s722] sm:$0xf]
      %v794 = vld [vmem:[%s722 + $0x4] sm:$0xf]
      %v795 = vld [vmem:[%s722 + $0x8] sm:$0xf]
      %v796 = vld [vmem:[%s722 + $0xc] sm:$0xf]
      %v797 = vld [vmem:[%s722 + $0x10] sm:$0xf]
      %v798 = vld [vmem:[%s722 + $0x14] sm:$0xf]
      %v799 = vld [vmem:[%s722 + $0x18] sm:$0xf]
      %v800 = vld [vmem:[%s722 + $0x1c] sm:$0xf]
      %v801 = vld [vmem:[%s722 + $0x20] sm:$0xf]
      %v802 = vld [vmem:[%s722 + $0x24] sm:$0xf]
      %v803 = vld [vmem:[%s722 + $0x28] sm:$0xf]
      %v804 = vld [vmem:[%s722 + $0x2c] sm:$0xf]
      %v805 = vld [vmem:[%s722 + $0x30] sm:$0xf]
      %v806 = vld [vmem:[%s722 + $0x34] sm:$0xf]
      %v807 = vld [vmem:[%s722 + $0x38] sm:$0xf]
      %v808 = vld [vmem:[%s722 + $0x3c] sm:$0xf]
      %v809 = vld [vmem:[%s727] sm:$0xf]
      %v810 = vld [vmem:[%s727 + $0x4] sm:$0xf]
      %v811 = vld [vmem:[%s727 + $0x8] sm:$0xf]
      %v812 = vld [vmem:[%s727 + $0xc] sm:$0xf]
      %v813 = vld [vmem:[%s727 + $0x10] sm:$0xf]
      %v814 = vld [vmem:[%s727 + $0x14] sm:$0xf]
      %v815 = vld [vmem:[%s727 + $0x18] sm:$0xf]
      %v816 = vld [vmem:[%s727 + $0x1c] sm:$0xf]
      %v817 = vld [vmem:[%s727 + $0x20] sm:$0xf]
      %v818 = vld [vmem:[%s727 + $0x24] sm:$0xf]
      %v819 = vld [vmem:[%s727 + $0x28] sm:$0xf]
      %v820 = vld [vmem:[%s727 + $0x2c] sm:$0xf]
      %v821 = vld [vmem:[%s727 + $0x30] sm:$0xf]
      %v822 = vld [vmem:[%s727 + $0x34] sm:$0xf]
      %v823 = vld [vmem:[%s727 + $0x38] sm:$0xf]
      %v824 = vld [vmem:[%s727 + $0x3c] sm:$0xf]
      %v825 = vld [vmem:[%s732] sm:$0xf]
      %v826 = vld [vmem:[%s732 + $0x4] sm:$0xf]
      %v827 = vld [vmem:[%s732 + $0x8] sm:$0xf]
      %v828 = vld [vmem:[%s732 + $0xc] sm:$0xf]
      %v829 = vld [vmem:[%s732 + $0x10] sm:$0xf]
      %v830 = vld [vmem:[%s732 + $0x14] sm:$0xf]
      %v831 = vld [vmem:[%s732 + $0x18] sm:$0xf]
      %v832 = vld [vmem:[%s732 + $0x1c] sm:$0xf]
      %v833 = vld [vmem:[%s732 + $0x20] sm:$0xf]
      %v834 = vld [vmem:[%s732 + $0x24] sm:$0xf]
      %v835 = vld [vmem:[%s732 + $0x28] sm:$0xf]
      %v836 = vld [vmem:[%s732 + $0x2c] sm:$0xf]
      %v837 = vld [vmem:[%s732 + $0x30] sm:$0xf]
      %v838 = vld [vmem:[%s732 + $0x34] sm:$0xf]
      %v839 = vld [vmem:[%s732 + $0x38] sm:$0xf]
      %v840 = vld [vmem:[%s732 + $0x3c] sm:$0xf]
      %v841 = vld [vmem:[%s737] sm:$0xf]
      %v842 = vld [vmem:[%s737 + $0x4] sm:$0xf]
      %v843 = vld [vmem:[%s737 + $0x8] sm:$0xf]
      %v844 = vld [vmem:[%s737 + $0xc] sm:$0xf]
      %v845 = vpack.c.bf16 %v788, %v788
      %v850 = vunpack.c.l.b16 %v793
      %v851 = vunpack.c.l.b16 %v794
      %v852 = vunpack.c.l.b16 %v795
      %v853 = vunpack.c.l.b16 %v796
      %v854 = vpack.c.b16 %v851, %v850
      %v855 = vpack.c.b16 %v853, %v852
      %vm858 = vcmask 261120
      %v860 = vsel %vm858, %v845, 0
      %862 = vmatpush.bf16.msra.mxu0 0
      %863 = vmatpush.bf16.msra.mxu0 0
      %864 = vmatpush.bf16.msra.mxu0 0
      %865 = vmatpush.bf16.msra.mxu0 0
      %866 = vmatpush.bf16.msra.mxu0 0
      %867 = vmatpush.bf16.msra.mxu0 0
      %868 = vmatpush.bf16.msra.mxu0 %v855
      %869 = vmatpush.bf16.msra.mxu0 %v854
      %870 = vmatmul.bf16.gmra.mxu0 %v860
      %v871 = vpop.f32.mrf.mxu0
      %v872 = vadd.f32 0.0, %v871
      %v873 = vpop.f32.mrf.mxu0
      %874 = vdwg.mxu0
      %v879 = vunpack.c.l.b16 %v797
      %v880 = vunpack.c.l.b16 %v798
      %v881 = vunpack.c.l.b16 %v799
      %v882 = vunpack.c.l.b16 %v800
      %v883 = vpack.c.b16 %v880, %v879
      %v884 = vpack.c.b16 %v882, %v881
      %887 = vmatpush.bf16.msra.mxu0 0
      %888 = vmatpush.bf16.msra.mxu0 0
      %889 = vmatpush.bf16.msra.mxu0 0
      %890 = vmatpush.bf16.msra.mxu0 0
      %891 = vmatpush.bf16.msra.mxu0 0
      %892 = vmatpush.bf16.msra.mxu0 0
      %893 = vmatpush.bf16.msra.mxu0 %v884
      %894 = vmatpush.bf16.msra.mxu0 %v883
      %895 = vmatmul.bf16.gmra.mxu0 %v860
      %v896 = vpop.f32.mrf.mxu0
      %v897 = vadd.f32 0.0, %v896
      %v898 = vpop.f32.mrf.mxu0
      %899 = vdwg.mxu0
      %v904 = vunpack.c.l.b16 %v801
      %v905 = vunpack.c.l.b16 %v802
      %v906 = vunpack.c.l.b16 %v803
      %v907 = vunpack.c.l.b16 %v804
      %v908 = vpack.c.b16 %v905, %v904
      %v909 = vpack.c.b16 %v907, %v906
      %912 = vmatpush.bf16.msra.mxu0 0
      %913 = vmatpush.bf16.msra.mxu0 0
      %914 = vmatpush.bf16.msra.mxu0 0
      %915 = vmatpush.bf16.msra.mxu0 0
      %916 = vmatpush.bf16.msra.mxu0 0
      %917 = vmatpush.bf16.msra.mxu0 0
      %918 = vmatpush.bf16.msra.mxu0 %v909
      %919 = vmatpush.bf16.msra.mxu0 %v908
      %920 = vmatmul.bf16.gmra.mxu0 %v860
      %v921 = vpop.f32.mrf.mxu0
      %v922 = vadd.f32 0.0, %v921
      %v923 = vpop.f32.mrf.mxu0
      %924 = vdwg.mxu0
      %v929 = vunpack.c.l.b16 %v805
      %v930 = vunpack.c.l.b16 %v806
      %v931 = vunpack.c.l.b16 %v807
      %v932 = vunpack.c.l.b16 %v808
      %v933 = vpack.c.b16 %v930, %v929
      %v934 = vpack.c.b16 %v932, %v931
      %937 = vmatpush.bf16.msra.mxu0 0
      %938 = vmatpush.bf16.msra.mxu0 0
      %939 = vmatpush.bf16.msra.mxu0 0
      %940 = vmatpush.bf16.msra.mxu0 0
      %941 = vmatpush.bf16.msra.mxu0 0
      %942 = vmatpush.bf16.msra.mxu0 0
      %943 = vmatpush.bf16.msra.mxu0 %v934
      %944 = vmatpush.bf16.msra.mxu0 %v933
      %945 = vmatmul.bf16.gmra.mxu0 %v860
      %v946 = vpop.f32.mrf.mxu0
      %v947 = vadd.f32 0.0, %v946
      %v948 = vpop.f32.mrf.mxu0
      %949 = vdwg.mxu0
      %v954 = vunpack.c.l.b16 %v809
      %v955 = vunpack.c.l.b16 %v810
      %v956 = vunpack.c.l.b16 %v811
      %v957 = vunpack.c.l.b16 %v812
      %v958 = vpack.c.b16 %v955, %v954
      %v959 = vpack.c.b16 %v957, %v956
      %962 = vmatpush.bf16.msra.mxu0 0
      %963 = vmatpush.bf16.msra.mxu0 0
      %964 = vmatpush.bf16.msra.mxu0 0
      %965 = vmatpush.bf16.msra.mxu0 0
      %966 = vmatpush.bf16.msra.mxu0 0
      %967 = vmatpush.bf16.msra.mxu0 0
      %968 = vmatpush.bf16.msra.mxu0 %v959
      %969 = vmatpush.bf16.msra.mxu0 %v958
      %970 = vmatmul.bf16.gmra.mxu0 %v860
      %v971 = vpop.f32.mrf.mxu0
      %v972 = vadd.f32 0.0, %v971
      %v973 = vpop.f32.mrf.mxu0
      %974 = vdwg.mxu0
      %v979 = vunpack.c.l.b16 %v813
      %v980 = vunpack.c.l.b16 %v814
      %v981 = vunpack.c.l.b16 %v815
      %v982 = vunpack.c.l.b16 %v816
      %v983 = vpack.c.b16 %v980, %v979
      %v984 = vpack.c.b16 %v982, %v981
      %987 = vmatpush.bf16.msra.mxu0 0
      %988 = vmatpush.bf16.msra.mxu0 0
      %989 = vmatpush.bf16.msra.mxu0 0
      %990 = vmatpush.bf16.msra.mxu0 0
      %991 = vmatpush.bf16.msra.mxu0 0
      %992 = vmatpush.bf16.msra.mxu0 0
      %993 = vmatpush.bf16.msra.mxu0 %v984
      %994 = vmatpush.bf16.msra.mxu0 %v983
      %995 = vmatmul.bf16.gmra.mxu0 %v860
      %v996 = vpop.f32.mrf.mxu0
      %v997 = vadd.f32 0.0, %v996
      %v998 = vpop.f32.mrf.mxu0
      %999 = vdwg.mxu0
      %v1004 = vunpack.c.l.b16 %v817
      %v1005 = vunpack.c.l.b16 %v818
      %v1006 = vunpack.c.l.b16 %v819
      %v1007 = vunpack.c.l.b16 %v820
      %v1008 = vpack.c.b16 %v1005, %v1004
      %v1009 = vpack.c.b16 %v1007, %v1006
      %1012 = vmatpush.bf16.msra.mxu0 0
      %1013 = vmatpush.bf16.msra.mxu0 0
      %1014 = vmatpush.bf16.msra.mxu0 0
      %1015 = vmatpush.bf16.msra.mxu0 0
      %1016 = vmatpush.bf16.msra.mxu0 0
      %1017 = vmatpush.bf16.msra.mxu0 0
      %1018 = vmatpush.bf16.msra.mxu0 %v1009
      %1019 = vmatpush.bf16.msra.mxu0 %v1008
      %1020 = vmatmul.bf16.gmra.mxu0 %v860
      %v1021 = vpop.f32.mrf.mxu0
      %v1022 = vadd.f32 0.0, %v1021
      %v1023 = vpop.f32.mrf.mxu0
      %1024 = vdwg.mxu0
      %v1029 = vunpack.c.l.b16 %v821
      %v1030 = vunpack.c.l.b16 %v822
      %v1031 = vunpack.c.l.b16 %v823
      %v1032 = vunpack.c.l.b16 %v824
      %v1033 = vpack.c.b16 %v1030, %v1029
      %v1034 = vpack.c.b16 %v1032, %v1031
      %1037 = vmatpush.bf16.msra.mxu0 0
      %1038 = vmatpush.bf16.msra.mxu0 0
      %1039 = vmatpush.bf16.msra.mxu0 0
      %1040 = vmatpush.bf16.msra.mxu0 0
      %1041 = vmatpush.bf16.msra.mxu0 0
      %1042 = vmatpush.bf16.msra.mxu0 0
      %1043 = vmatpush.bf16.msra.mxu0 %v1034
      %1044 = vmatpush.bf16.msra.mxu0 %v1033
      %1045 = vmatmul.bf16.gmra.mxu0 %v860
      %v1046 = vpop.f32.mrf.mxu0
      %v1047 = vadd.f32 0.0, %v1046
      %v1048 = vpop.f32.mrf.mxu0
      %1049 = vdwg.mxu0
      %v1054 = vunpack.c.l.b16 %v825
      %v1055 = vunpack.c.l.b16 %v826
      %v1056 = vunpack.c.l.b16 %v827
      %v1057 = vunpack.c.l.b16 %v828
      %v1058 = vpack.c.b16 %v1055, %v1054
      %v1059 = vpack.c.b16 %v1057, %v1056
      %1062 = vmatpush.bf16.msra.mxu0 0
      %1063 = vmatpush.bf16.msra.mxu0 0
      %1064 = vmatpush.bf16.msra.mxu0 0
      %1065 = vmatpush.bf16.msra.mxu0 0
      %1066 = vmatpush.bf16.msra.mxu0 0
      %1067 = vmatpush.bf16.msra.mxu0 0
      %1068 = vmatpush.bf16.msra.mxu0 %v1059
      %1069 = vmatpush.bf16.msra.mxu0 %v1058
      %1070 = vmatmul.bf16.gmra.mxu0 %v860
      %v1071 = vpop.f32.mrf.mxu0
      %v1072 = vadd.f32 0.0, %v1071
      %v1073 = vpop.f32.mrf.mxu0
      %1074 = vdwg.mxu0
      %v1079 = vunpack.c.l.b16 %v829
      %v1080 = vunpack.c.l.b16 %v830
      %v1081 = vunpack.c.l.b16 %v831
      %v1082 = vunpack.c.l.b16 %v832
      %v1083 = vpack.c.b16 %v1080, %v1079
      %v1084 = vpack.c.b16 %v1082, %v1081
      %1087 = vmatpush.bf16.msra.mxu0 0
      %1088 = vmatpush.bf16.msra.mxu0 0
      %1089 = vmatpush.bf16.msra.mxu0 0
      %1090 = vmatpush.bf16.msra.mxu0 0
      %1091 = vmatpush.bf16.msra.mxu0 0
      %1092 = vmatpush.bf16.msra.mxu0 0
      %1093 = vmatpush.bf16.msra.mxu0 %v1084
      %1094 = vmatpush.bf16.msra.mxu0 %v1083
      %1095 = vmatmul.bf16.gmra.mxu0 %v860
      %v1096 = vpop.f32.mrf.mxu0
      %v1097 = vadd.f32 0.0, %v1096
      %v1098 = vpop.f32.mrf.mxu0
      %1099 = vdwg.mxu0
      %v1104 = vunpack.c.l.b16 %v833
      %v1105 = vunpack.c.l.b16 %v834
      %v1106 = vunpack.c.l.b16 %v835
      %v1107 = vunpack.c.l.b16 %v836
      %v1108 = vpack.c.b16 %v1105, %v1104
      %v1109 = vpack.c.b16 %v1107, %v1106
      %1112 = vmatpush.bf16.msra.mxu0 0
      %1113 = vmatpush.bf16.msra.mxu0 0
      %1114 = vmatpush.bf16.msra.mxu0 0
      %1115 = vmatpush.bf16.msra.mxu0 0
      %1116 = vmatpush.bf16.msra.mxu0 0
      %1117 = vmatpush.bf16.msra.mxu0 0
      %1118 = vmatpush.bf16.msra.mxu0 %v1109
      %1119 = vmatpush.bf16.msra.mxu0 %v1108
      %1120 = vmatmul.bf16.gmra.mxu0 %v860
      %v1121 = vpop.f32.mrf.mxu0
      %v1122 = vadd.f32 0.0, %v1121
      %v1123 = vpop.f32.mrf.mxu0
      %1124 = vdwg.mxu0
      %v1129 = vunpack.c.l.b16 %v837
      %v1130 = vunpack.c.l.b16 %v838
      %v1131 = vunpack.c.l.b16 %v839
      %v1132 = vunpack.c.l.b16 %v840
      %v1133 = vpack.c.b16 %v1130, %v1129
      %v1134 = vpack.c.b16 %v1132, %v1131
      %1137 = vmatpush.bf16.msra.mxu0 0
      %1138 = vmatpush.bf16.msra.mxu0 0
      %1139 = vmatpush.bf16.msra.mxu0 0
      %1140 = vmatpush.bf16.msra.mxu0 0
      %1141 = vmatpush.bf16.msra.mxu0 0
      %1142 = vmatpush.bf16.msra.mxu0 0
      %1143 = vmatpush.bf16.msra.mxu0 %v1134
      %1144 = vmatpush.bf16.msra.mxu0 %v1133
      %1145 = vmatmul.bf16.gmra.mxu0 %v860
      %v1146 = vpop.f32.mrf.mxu0
      %v1147 = vadd.f32 0.0, %v1146
      %v1148 = vpop.f32.mrf.mxu0
      %1149 = vdwg.mxu0
      %v1150 = vpack.c.bf16 %v872, %v872
      %v1151 = vpack.c.bf16 %v897, %v897
      %v1152 = vpack.c.bf16 %v922, %v922
      %v1153 = vpack.c.bf16 %v947, %v947
      %v1154 = vpack.c.bf16 %v972, %v972
      %v1155 = vpack.c.bf16 %v997, %v997
      %v1156 = vpack.c.bf16 %v1022, %v1022
      %v1157 = vpack.c.bf16 %v1047, %v1047
      %vm1158 = vcmask 64512
      %v1160 = vsel %vm1158, %v1150, 0
      %v1163 = vsel %vm1158, %v1154, 0
      %1165 = vmatpush.bf16.xpose.msra.mxu0 0
      %1166 = vmatpush.bf16.xpose.msra.mxu0 0
      %1167 = vmatpush.bf16.xpose.msra.mxu0 0
      %1168 = vmatpush.bf16.xpose.msra.mxu0 0
      %1169 = vmatpush.bf16.xpose.msra.mxu0 0
      %1170 = vmatpush.bf16.xpose.msra.mxu0 0
      %1171 = vmatpush.bf16.xpose.msra.mxu0 0
      %1172 = vmatpush.bf16.xpose.msra.mxu0 %v1163
      %1173 = vmatmul.bf16.gmra.mxu0 %v1160
      %v1174 = vpop.f32.mrf.mxu0
      %v1175 = vadd.f32 %v792, %v1174
      %v1176 = vpop.f32.mrf.mxu0
      %1177 = vdwg.mxu0
      %v1179 = vsel %vm1158, %v1151, 0
      %v1182 = vsel %vm1158, %v1155, 0
      %1184 = vmatpush.bf16.xpose.msra.mxu0 0
      %1185 = vmatpush.bf16.xpose.msra.mxu0 0
      %1186 = vmatpush.bf16.xpose.msra.mxu0 0
      %1187 = vmatpush.bf16.xpose.msra.mxu0 0
      %1188 = vmatpush.bf16.xpose.msra.mxu0 0
      %1189 = vmatpush.bf16.xpose.msra.mxu0 0
      %1190 = vmatpush.bf16.xpose.msra.mxu0 0
      %1191 = vmatpush.bf16.xpose.msra.mxu0 %v1182
      %1192 = vmatmul.bf16.gmra.mxu0 %v1179
      %v1193 = vpop.f32.mrf.mxu0
      %v1194 = vadd.f32 %v792, %v1193
      %v1195 = vpop.f32.mrf.mxu0
      %1196 = vdwg.mxu0
      %v1198 = vsel %vm1158, %v1152, 0
      %v1201 = vsel %vm1158, %v1156, 0
      %1203 = vmatpush.bf16.xpose.msra.mxu0 0
      %1204 = vmatpush.bf16.xpose.msra.mxu0 0
      %1205 = vmatpush.bf16.xpose.msra.mxu0 0
      %1206 = vmatpush.bf16.xpose.msra.mxu0 0
      %1207 = vmatpush.bf16.xpose.msra.mxu0 0
      %1208 = vmatpush.bf16.xpose.msra.mxu0 0
      %1209 = vmatpush.bf16.xpose.msra.mxu0 0
      %1210 = vmatpush.bf16.xpose.msra.mxu0 %v1201
      %1211 = vmatmul.bf16.gmra.mxu0 %v1198
      %v1212 = vpop.f32.mrf.mxu0
      %v1213 = vadd.f32 %v792, %v1212
      %v1214 = vpop.f32.mrf.mxu0
      %1215 = vdwg.mxu0
      %v1217 = vsel %vm1158, %v1153, 0
      %v1220 = vsel %vm1158, %v1157, 0
      %1222 = vmatpush.bf16.xpose.msra.mxu0 0
      %1223 = vmatpush.bf16.xpose.msra.mxu0 0
      %1224 = vmatpush.bf16.xpose.msra.mxu0 0
      %1225 = vmatpush.bf16.xpose.msra.mxu0 0
      %1226 = vmatpush.bf16.xpose.msra.mxu0 0
      %1227 = vmatpush.bf16.xpose.msra.mxu0 0
      %1228 = vmatpush.bf16.xpose.msra.mxu0 0
      %1229 = vmatpush.bf16.xpose.msra.mxu0 %v1220
      %1230 = vmatmul.bf16.gmra.mxu0 %v1217
      %v1231 = vpop.f32.mrf.mxu0
      %v1232 = vadd.f32 %v792, %v1231
      %v1233 = vpop.f32.mrf.mxu0
      %1234 = vdwg.mxu0
      %v1235 = vmul.f32 %v1175, 0.17677669
      %v1236 = vmul.f32 %v1194, 0.17677669
      %v1237 = vmul.f32 %v1213, 0.17677669
      %v1238 = vmul.f32 %v1232, 0.17677669
      %v1239 = vsel %vm1158, %v1235, -inf
      %1240 = vmax.xlane.f32.xlu0 %v1239
      %v1241 = vpop.xlane.xlu0 %1240
      %v1242 = vsel %vm1158, %v1236, -inf
      %1243 = vmax.xlane.f32.xlu0 %v1242
      %v1244 = vpop.xlane.xlu0 %1243
      %v1245 = vsel %vm1158, %v1237, -inf
      %1246 = vmax.xlane.f32.xlu0 %v1245
      %v1247 = vpop.xlane.xlu0 %1246
      %v1248 = vsel %vm1158, %v1238, -inf
      %1249 = vmax.xlane.f32.xlu0 %v1248
      %v1250 = vpop.xlane.xlu0 %1249
      %v1251 = vsub.f32 %v1235, %v1241
      %v1252 = vsub.f32 %v1236, %v1244
      %v1253 = vsub.f32 %v1237, %v1247
      %v1254 = vsub.f32 %v1238, %v1250
      %v1255 = vmul.f32 %v1251, 1.442695
      %v1256 = vpow.pop %v1255
      %v1257 = vmul.f32 %v1252, 1.442695
      %v1258 = vpow.pop %v1257
      %v1259 = vmul.f32 %v1253, 1.442695
      %v1260 = vpow.pop %v1259
      %v1261 = vmul.f32 %v1254, 1.442695
      %v1262 = vpow.pop %v1261
      %v1263 = vsel %vm1158, %v1256, 0.0
      %1264 = vadd.xlane.f32.xlu0 %v1263
      %v1265 = vpop.xlane.xlu0 %1264
      %v1266 = vsel %vm1158, %v1258, 0.0
      %1267 = vadd.xlane.f32.xlu0 %v1266
      %v1268 = vpop.xlane.xlu0 %1267
      %v1269 = vsel %vm1158, %v1260, 0.0
      %1270 = vadd.xlane.f32.xlu0 %v1269
      %v1271 = vpop.xlane.xlu0 %1270
      %v1272 = vsel %vm1158, %v1262, 0.0
      %1273 = vadd.xlane.f32.xlu0 %v1272
      %v1274 = vpop.xlane.xlu0 %1273
      %v1275 = vrcp.pop %v1265
      %v1276 = vrcp.pop %v1268
      %v1277 = vrcp.pop %v1271
      %v1278 = vrcp.pop %v1274
      %v1279 = vmul.f32 %v1256, %v1275
      %v1280 = vmul.f32 %v1258, %v1276
      %v1281 = vmul.f32 %v1260, %v1277
      %v1282 = vmul.f32 %v1262, %v1278
      %v1283 = vpack.c.bf16 %v1279, %v1279
      %v1284 = vpack.c.bf16 %v1280, %v1280
      %v1285 = vpack.c.bf16 %v1281, %v1281
      %v1286 = vpack.c.bf16 %v1282, %v1282
      %v1287 = vpack.c.bf16 %v1072, %v1072
      %v1288 = vpack.c.bf16 %v1097, %v1097
      %v1289 = vpack.c.bf16 %v1122, %v1122
      %v1290 = vpack.c.bf16 %v1147, %v1147
      %v1292 = vsel %vm1158, %v1283, 0
      %vm1294 = vcmask 1043456
      %v1296 = vsel %vm1294, %v1287, 0
      %1298 = vmatpush.bf16.msra.mxu0 0
      %1299 = vmatpush.bf16.msra.mxu0 0
      %1300 = vmatpush.bf16.msra.mxu0 0
      %1301 = vmatpush.bf16.msra.mxu0 0
      %1302 = vmatpush.bf16.msra.mxu0 0
      %1303 = vmatpush.bf16.msra.mxu0 0
      %1304 = vmatpush.bf16.msra.mxu0 0
      %1305 = vmatpush.bf16.msra.mxu0 %v1296
      %1306 = vmatmul.bf16.gmra.mxu0 %v1292
      %v1307 = vpop.f32.mrf.mxu0
      %v1308 = vadd.f32 0.0, %v1307
      %v1309 = vpop.f32.mrf.mxu0
      %1310 = vdwg.mxu0
      %v1312 = vsel %vm1158, %v1284, 0
      %v1315 = vsel %vm1294, %v1288, 0
      %1317 = vmatpush.bf16.msra.mxu0 0
      %1318 = vmatpush.bf16.msra.mxu0 0
      %1319 = vmatpush.bf16.msra.mxu0 0
      %1320 = vmatpush.bf16.msra.mxu0 0
      %1321 = vmatpush.bf16.msra.mxu0 0
      %1322 = vmatpush.bf16.msra.mxu0 0
      %1323 = vmatpush.bf16.msra.mxu0 0
      %1324 = vmatpush.bf16.msra.mxu0 %v1315
      %1325 = vmatmul.bf16.gmra.mxu0 %v1312
      %v1326 = vpop.f32.mrf.mxu0
      %v1327 = vadd.f32 0.0, %v1326
      %v1328 = vpop.f32.mrf.mxu0
      %1329 = vdwg.mxu0
      %v1331 = vsel %vm1158, %v1285, 0
      %v1334 = vsel %vm1294, %v1289, 0
      %1336 = vmatpush.bf16.msra.mxu0 0
      %1337 = vmatpush.bf16.msra.mxu0 0
      %1338 = vmatpush.bf16.msra.mxu0 0
      %1339 = vmatpush.bf16.msra.mxu0 0
      %1340 = vmatpush.bf16.msra.mxu0 0
      %1341 = vmatpush.bf16.msra.mxu0 0
      %1342 = vmatpush.bf16.msra.mxu0 0
      %1343 = vmatpush.bf16.msra.mxu0 %v1334
      %1344 = vmatmul.bf16.gmra.mxu0 %v1331
      %v1345 = vpop.f32.mrf.mxu0
      %v1346 = vadd.f32 0.0, %v1345
      %v1347 = vpop.f32.mrf.mxu0
      %1348 = vdwg.mxu0
      %v1350 = vsel %vm1158, %v1286, 0
      %v1353 = vsel %vm1294, %v1290, 0
      %1355 = vmatpush.bf16.msra.mxu0 0
      %1356 = vmatpush.bf16.msra.mxu0 0
      %1357 = vmatpush.bf16.msra.mxu0 0
      %1358 = vmatpush.bf16.msra.mxu0 0
      %1359 = vmatpush.bf16.msra.mxu0 0
      %1360 = vmatpush.bf16.msra.mxu0 0
      %1361 = vmatpush.bf16.msra.mxu0 0
      %1362 = vmatpush.bf16.msra.mxu0 %v1353
      %1363 = vmatmul.bf16.gmra.mxu0 %v1350
      %v1364 = vpop.f32.mrf.mxu0
      %v1365 = vadd.f32 0.0, %v1364
      %v1366 = vpop.f32.mrf.mxu0
      %1367 = vdwg.mxu0
      %v1368 = vpack.c.bf16 %v1308, %v1308
      %v1369 = vpack.c.bf16 %v1327, %v1327
      %v1370 = vpack.c.bf16 %v1346, %v1346
      %v1371 = vpack.c.bf16 %v1365, %v1365
      %v1373 = vsel %vm1158, %v1368, 0
      %v1376 = vsel %vm1294, %v841, 0
      %1378 = vmatpush.bf16.msra.mxu0 0
      %1379 = vmatpush.bf16.msra.mxu0 0
      %1380 = vmatpush.bf16.msra.mxu0 0
      %1381 = vmatpush.bf16.msra.mxu0 0
      %1382 = vmatpush.bf16.msra.mxu0 0
      %1383 = vmatpush.bf16.msra.mxu0 0
      %1384 = vmatpush.bf16.msra.mxu0 0
      %1385 = vmatpush.bf16.msra.mxu0 %v1376
      %1386 = vmatmul.bf16.gmra.mxu0 %v1373
      %v1387 = vpop.f32.mrf.mxu0
      %v1388 = vadd.f32 0.0, %v1387
      %v1389 = vpop.f32.mrf.mxu0
      %1390 = vdwg.mxu0
      %v1392 = vsel %vm1158, %v1369, 0
      %v1395 = vsel %vm1294, %v842, 0
      %1397 = vmatpush.bf16.msra.mxu0 0
      %1398 = vmatpush.bf16.msra.mxu0 0
      %1399 = vmatpush.bf16.msra.mxu0 0
      %1400 = vmatpush.bf16.msra.mxu0 0
      %1401 = vmatpush.bf16.msra.mxu0 0
      %1402 = vmatpush.bf16.msra.mxu0 0
      %1403 = vmatpush.bf16.msra.mxu0 0
      %1404 = vmatpush.bf16.msra.mxu0 %v1395
      %1405 = vmatmul.bf16.gmra.mxu0 %v1392
      %v1406 = vpop.f32.mrf.mxu0
      %v1407 = vadd.f32 0.0, %v1406
      %v1408 = vpop.f32.mrf.mxu0
      %1409 = vdwg.mxu0
      %v1411 = vsel %vm1158, %v1370, 0
      %v1414 = vsel %vm1294, %v843, 0
      %1416 = vmatpush.bf16.msra.mxu0 0
      %1417 = vmatpush.bf16.msra.mxu0 0
      %1418 = vmatpush.bf16.msra.mxu0 0
      %1419 = vmatpush.bf16.msra.mxu0 0
      %1420 = vmatpush.bf16.msra.mxu0 0
      %1421 = vmatpush.bf16.msra.mxu0 0
      %1422 = vmatpush.bf16.msra.mxu0 0
      %1423 = vmatpush.bf16.msra.mxu0 %v1414
      %1424 = vmatmul.bf16.gmra.mxu0 %v1411
      %v1425 = vpop.f32.mrf.mxu0
      %v1426 = vadd.f32 0.0, %v1425
      %v1427 = vpop.f32.mrf.mxu0
      %1428 = vdwg.mxu0
      %v1430 = vsel %vm1158, %v1371, 0
      %v1433 = vsel %vm1294, %v844, 0
      %1435 = vmatpush.bf16.msra.mxu0 0
      %1436 = vmatpush.bf16.msra.mxu0 0
      %1437 = vmatpush.bf16.msra.mxu0 0
      %1438 = vmatpush.bf16.msra.mxu0 0
      %1439 = vmatpush.bf16.msra.mxu0 0
      %1440 = vmatpush.bf16.msra.mxu0 0
      %1441 = vmatpush.bf16.msra.mxu0 0
      %1442 = vmatpush.bf16.msra.mxu0 %v1433
      %1443 = vmatmul.bf16.gmra.mxu0 %v1430
      %v1444 = vpop.f32.mrf.mxu0
      %v1445 = vadd.f32 0.0, %v1444
      %v1446 = vpop.f32.mrf.mxu0
      %1447 = vdwg.mxu0
      %v1448 = vadd.f32 %v1388, %v1407
      %v1449 = vadd.f32 %v1448, %v1426
      %v1450 = vadd.f32 %v1449, %v1445
      %v1451 = vperm.slane %v790, 0
      %v1452 = vadd.f32 %v1450, %v1451
      %v1453 = vadd.f32 %v1452, %v788
      %v1454 = vsel %vm858, %v1453, 0.0
      %1455 = vadd.xlane.f32.xlu0 %v1454
      %v1456 = vpop.xlane.xlu0 %1455
      %v1457 = vrcp.pop 32.0
      %v1458 = vmul.f32 32.0, %v1457
      %v1459 = vsub.f32 1.0, %v1458
      %v1460 = vmul.f32 %v1457, %v1459
      %v1461 = vadd.f32 %v1457, %v1460
      %vm1462 = vweird.f32 %v1457
      %v1463 = vsel %vm1462, %v1457, %v1461
      %v1464 = vmul.f32 %v1456, %v1463
      %v1465 = vsub.f32 %v1453, %v1464
      %v1466 = vmul.f32 %v1465, %v1465
      %v1467 = vsel %vm858, %v1466, 0.0
      %1468 = vadd.xlane.f32.xlu0 %v1467
      %v1469 = vpop.xlane.xlu0 %1468
      %v1470 = vmul.f32 %v1469, %v1463
      %v1471 = vadd.f32 %v1470, 1e-05
      %v1472 = vrsqrt.pop %v1471
      %v1473 = vmul.f32 %v1472, %v1471
      %v1474 = vmul.f32 %v1473, %v1472
      %v1475 = vmul.f32 0.5, %v1474
      %v1476 = vsub.f32 1.5, %v1475
      %v1477 = vmul.f32 %v1472, %v1476
      %vm1478 = vweird.f32 %v1471
      %vm1479 = vweird.f32 %v1472
      %vm1480 = vmor %vm1478, %vm1479
      %v1481 = vsel %vm1480, %v1472, %v1477
      %v1482 = vmul.f32 %v1465, %v1481
      %v1483 = vperm.slane %v790, 1
      %v1484 = vmul.f32 %v1482, %v1483
      %v1485 = vperm.slane %v790, 2
      %v1486 = vadd.f32 %v1484, %v1485
      %v1487 = vld [vmem:[%s3] sm:$0xff]
      %v1488 = vld [vmem:[%s742] sm:$0xf]
      %v1489 = vld [vmem:[%s742 + $0x4] sm:$0xf]
      %v1490 = vld [vmem:[%s742 + $0x8] sm:$0xf]
      %v1491 = vld [vmem:[%s742 + $0xc] sm:$0xf]
      %v1492 = vld [vmem:[%s742 + $0x10] sm:$0xf]
      %v1493 = vld [vmem:[%s742 + $0x14] sm:$0xf]
      %v1494 = vld [vmem:[%s742 + $0x18] sm:$0xf]
      %v1495 = vld [vmem:[%s742 + $0x1c] sm:$0xf]
      %v1496 = vld [vmem:[%s742 + $0x20] sm:$0xf]
      %v1497 = vld [vmem:[%s742 + $0x24] sm:$0xf]
      %v1498 = vld [vmem:[%s742 + $0x28] sm:$0xf]
      %v1499 = vld [vmem:[%s742 + $0x2c] sm:$0xf]
      %v1500 = vld [vmem:[%s742 + $0x30] sm:$0xf]
      %v1501 = vld [vmem:[%s742 + $0x34] sm:$0xf]
      %v1502 = vld [vmem:[%s742 + $0x38] sm:$0xf]
      %v1503 = vld [vmem:[%s742 + $0x3c] sm:$0xf]
      %v1504 = vld [vmem:[%s747] sm:$0xf]
      %v1505 = vld [vmem:[%s747 + $0x4] sm:$0xf]
      %v1506 = vld [vmem:[%s747 + $0x8] sm:$0xf]
      %v1507 = vld [vmem:[%s747 + $0xc] sm:$0xf]
      %v1508 = vld [vmem:[%s747 + $0x10] sm:$0xf]
      %v1509 = vld [vmem:[%s747 + $0x14] sm:$0xf]
      %v1510 = vld [vmem:[%s747 + $0x18] sm:$0xf]
      %v1511 = vld [vmem:[%s747 + $0x1c] sm:$0xf]
      %v1512 = vld [vmem:[%s747 + $0x20] sm:$0xf]
      %v1513 = vld [vmem:[%s747 + $0x24] sm:$0xf]
      %v1514 = vld [vmem:[%s747 + $0x28] sm:$0xf]
      %v1515 = vld [vmem:[%s747 + $0x2c] sm:$0xf]
      %v1516 = vld [vmem:[%s747 + $0x30] sm:$0xf]
      %v1517 = vld [vmem:[%s747 + $0x34] sm:$0xf]
      %v1518 = vld [vmem:[%s747 + $0x38] sm:$0xf]
      %v1519 = vld [vmem:[%s747 + $0x3c] sm:$0xf]
      %v1520 = vld [vmem:[%s752] sm:$0xf]
      %v1521 = vld [vmem:[%s752 + $0x4] sm:$0xf]
      %v1522 = vld [vmem:[%s752 + $0x8] sm:$0xf]
      %v1523 = vld [vmem:[%s752 + $0xc] sm:$0xf]
      %v1524 = vld [vmem:[%s752 + $0x10] sm:$0xf]
      %v1525 = vld [vmem:[%s752 + $0x14] sm:$0xf]
      %v1526 = vld [vmem:[%s752 + $0x18] sm:$0xf]
      %v1527 = vld [vmem:[%s752 + $0x1c] sm:$0xf]
      %v1528 = vld [vmem:[%s752 + $0x20] sm:$0xf]
      %v1529 = vld [vmem:[%s752 + $0x24] sm:$0xf]
      %v1530 = vld [vmem:[%s752 + $0x28] sm:$0xf]
      %v1531 = vld [vmem:[%s752 + $0x2c] sm:$0xf]
      %v1532 = vld [vmem:[%s752 + $0x30] sm:$0xf]
      %v1533 = vld [vmem:[%s752 + $0x34] sm:$0xf]
      %v1534 = vld [vmem:[%s752 + $0x38] sm:$0xf]
      %v1535 = vld [vmem:[%s752 + $0x3c] sm:$0xf]
      %v1536 = vld [vmem:[%s757] sm:$0xf]
      %v1537 = vld [vmem:[%s757 + $0x4] sm:$0xf]
      %v1538 = vld [vmem:[%s757 + $0x8] sm:$0xf]
      %v1539 = vld [vmem:[%s757 + $0xc] sm:$0xf]
      %v1540 = vpack.c.bf16 %v1486, %v1486
      %v1545 = vunpack.c.l.b16 %v1488
      %v1546 = vunpack.c.l.b16 %v1489
      %v1547 = vunpack.c.l.b16 %v1490
      %v1548 = vunpack.c.l.b16 %v1491
      %v1549 = vpack.c.b16 %v1546, %v1545
      %v1550 = vpack.c.b16 %v1548, %v1547
      %v1554 = vsel %vm858, %v1540, 0
      %1556 = vmatpush.bf16.msra.mxu0 0
      %1557 = vmatpush.bf16.msra.mxu0 0
      %1558 = vmatpush.bf16.msra.mxu0 0
      %1559 = vmatpush.bf16.msra.mxu0 0
      %1560 = vmatpush.bf16.msra.mxu0 0
      %1561 = vmatpush.bf16.msra.mxu0 0
      %1562 = vmatpush.bf16.msra.mxu0 %v1550
      %1563 = vmatpush.bf16.msra.mxu0 %v1549
      %1564 = vmatmul.bf16.gmra.mxu0 %v1554
      %v1565 = vpop.f32.mrf.mxu0
      %v1566 = vadd.f32 0.0, %v1565
      %v1567 = vpop.f32.mrf.mxu0
      %1568 = vdwg.mxu0
      %v1573 = vunpack.c.l.b16 %v1492
      %v1574 = vunpack.c.l.b16 %v1493
      %v1575 = vunpack.c.l.b16 %v1494
      %v1576 = vunpack.c.l.b16 %v1495
      %v1577 = vpack.c.b16 %v1574, %v1573
      %v1578 = vpack.c.b16 %v1576, %v1575
      %1581 = vmatpush.bf16.msra.mxu0 0
      %1582 = vmatpush.bf16.msra.mxu0 0
      %1583 = vmatpush.bf16.msra.mxu0 0
      %1584 = vmatpush.bf16.msra.mxu0 0
      %1585 = vmatpush.bf16.msra.mxu0 0
      %1586 = vmatpush.bf16.msra.mxu0 0
      %1587 = vmatpush.bf16.msra.mxu0 %v1578
      %1588 = vmatpush.bf16.msra.mxu0 %v1577
      %1589 = vmatmul.bf16.gmra.mxu0 %v1554
      %v1590 = vpop.f32.mrf.mxu0
      %v1591 = vadd.f32 0.0, %v1590
      %v1592 = vpop.f32.mrf.mxu0
      %1593 = vdwg.mxu0
      %v1598 = vunpack.c.l.b16 %v1496
      %v1599 = vunpack.c.l.b16 %v1497
      %v1600 = vunpack.c.l.b16 %v1498
      %v1601 = vunpack.c.l.b16 %v1499
      %v1602 = vpack.c.b16 %v1599, %v1598
      %v1603 = vpack.c.b16 %v1601, %v1600
      %1606 = vmatpush.bf16.msra.mxu0 0
      %1607 = vmatpush.bf16.msra.mxu0 0
      %1608 = vmatpush.bf16.msra.mxu0 0
      %1609 = vmatpush.bf16.msra.mxu0 0
      %1610 = vmatpush.bf16.msra.mxu0 0
      %1611 = vmatpush.bf16.msra.mxu0 0
      %1612 = vmatpush.bf16.msra.mxu0 %v1603
      %1613 = vmatpush.bf16.msra.mxu0 %v1602
      %1614 = vmatmul.bf16.gmra.mxu0 %v1554
      %v1615 = vpop.f32.mrf.mxu0
      %v1616 = vadd.f32 0.0, %v1615
      %v1617 = vpop.f32.mrf.mxu0
      %1618 = vdwg.mxu0
      %v1623 = vunpack.c.l.b16 %v1500
      %v1624 = vunpack.c.l.b16 %v1501
      %v1625 = vunpack.c.l.b16 %v1502
      %v1626 = vunpack.c.l.b16 %v1503
      %v1627 = vpack.c.b16 %v1624, %v1623
      %v1628 = vpack.c.b16 %v1626, %v1625
      %1631 = vmatpush.bf16.msra.mxu0 0
      %1632 = vmatpush.bf16.msra.mxu0 0
      %1633 = vmatpush.bf16.msra.mxu0 0
      %1634 = vmatpush.bf16.msra.mxu0 0
      %1635 = vmatpush.bf16.msra.mxu0 0
      %1636 = vmatpush.bf16.msra.mxu0 0
      %1637 = vmatpush.bf16.msra.mxu0 %v1628
      %1638 = vmatpush.bf16.msra.mxu0 %v1627
      %1639 = vmatmul.bf16.gmra.mxu0 %v1554
      %v1640 = vpop.f32.mrf.mxu0
      %v1641 = vadd.f32 0.0, %v1640
      %v1642 = vpop.f32.mrf.mxu0
      %1643 = vdwg.mxu0
      %v1648 = vunpack.c.l.b16 %v1504
      %v1649 = vunpack.c.l.b16 %v1505
      %v1650 = vunpack.c.l.b16 %v1506
      %v1651 = vunpack.c.l.b16 %v1507
      %v1652 = vpack.c.b16 %v1649, %v1648
      %v1653 = vpack.c.b16 %v1651, %v1650
      %v1657 = vsel %vm858, %v789, 0
      %1659 = vmatpush.bf16.msra.mxu0 0
      %1660 = vmatpush.bf16.msra.mxu0 0
      %1661 = vmatpush.bf16.msra.mxu0 0
      %1662 = vmatpush.bf16.msra.mxu0 0
      %1663 = vmatpush.bf16.msra.mxu0 0
      %1664 = vmatpush.bf16.msra.mxu0 0
      %1665 = vmatpush.bf16.msra.mxu0 %v1653
      %1666 = vmatpush.bf16.msra.mxu0 %v1652
      %1667 = vmatmul.bf16.gmra.mxu0 %v1657
      %v1668 = vpop.f32.mrf.mxu0
      %v1669 = vadd.f32 0.0, %v1668
      %v1670 = vpop.f32.mrf.mxu0
      %1671 = vdwg.mxu0
      %v1676 = vunpack.c.l.b16 %v1508
      %v1677 = vunpack.c.l.b16 %v1509
      %v1678 = vunpack.c.l.b16 %v1510
      %v1679 = vunpack.c.l.b16 %v1511
      %v1680 = vpack.c.b16 %v1677, %v1676
      %v1681 = vpack.c.b16 %v1679, %v1678
      %1684 = vmatpush.bf16.msra.mxu0 0
      %1685 = vmatpush.bf16.msra.mxu0 0
      %1686 = vmatpush.bf16.msra.mxu0 0
      %1687 = vmatpush.bf16.msra.mxu0 0
      %1688 = vmatpush.bf16.msra.mxu0 0
      %1689 = vmatpush.bf16.msra.mxu0 0
      %1690 = vmatpush.bf16.msra.mxu0 %v1681
      %1691 = vmatpush.bf16.msra.mxu0 %v1680
      %1692 = vmatmul.bf16.gmra.mxu0 %v1657
      %v1693 = vpop.f32.mrf.mxu0
      %v1694 = vadd.f32 0.0, %v1693
      %v1695 = vpop.f32.mrf.mxu0
      %1696 = vdwg.mxu0
      %v1701 = vunpack.c.l.b16 %v1512
      %v1702 = vunpack.c.l.b16 %v1513
      %v1703 = vunpack.c.l.b16 %v1514
      %v1704 = vunpack.c.l.b16 %v1515
      %v1705 = vpack.c.b16 %v1702, %v1701
      %v1706 = vpack.c.b16 %v1704, %v1703
      %1709 = vmatpush.bf16.msra.mxu0 0
      %1710 = vmatpush.bf16.msra.mxu0 0
      %1711 = vmatpush.bf16.msra.mxu0 0
      %1712 = vmatpush.bf16.msra.mxu0 0
      %1713 = vmatpush.bf16.msra.mxu0 0
      %1714 = vmatpush.bf16.msra.mxu0 0
      %1715 = vmatpush.bf16.msra.mxu0 %v1706
      %1716 = vmatpush.bf16.msra.mxu0 %v1705
      %1717 = vmatmul.bf16.gmra.mxu0 %v1657
      %v1718 = vpop.f32.mrf.mxu0
      %v1719 = vadd.f32 0.0, %v1718
      %v1720 = vpop.f32.mrf.mxu0
      %1721 = vdwg.mxu0
      %v1726 = vunpack.c.l.b16 %v1516
      %v1727 = vunpack.c.l.b16 %v1517
      %v1728 = vunpack.c.l.b16 %v1518
      %v1729 = vunpack.c.l.b16 %v1519
      %v1730 = vpack.c.b16 %v1727, %v1726
      %v1731 = vpack.c.b16 %v1729, %v1728
      %1734 = vmatpush.bf16.msra.mxu0 0
      %1735 = vmatpush.bf16.msra.mxu0 0
      %1736 = vmatpush.bf16.msra.mxu0 0
      %1737 = vmatpush.bf16.msra.mxu0 0
      %1738 = vmatpush.bf16.msra.mxu0 0
      %1739 = vmatpush.bf16.msra.mxu0 0
      %1740 = vmatpush.bf16.msra.mxu0 %v1731
      %1741 = vmatpush.bf16.msra.mxu0 %v1730
      %1742 = vmatmul.bf16.gmra.mxu0 %v1657
      %v1743 = vpop.f32.mrf.mxu0
      %v1744 = vadd.f32 0.0, %v1743
      %v1745 = vpop.f32.mrf.mxu0
      %1746 = vdwg.mxu0
      %v1751 = vunpack.c.l.b16 %v1520
      %v1752 = vunpack.c.l.b16 %v1521
      %v1753 = vunpack.c.l.b16 %v1522
      %v1754 = vunpack.c.l.b16 %v1523
      %v1755 = vpack.c.b16 %v1752, %v1751
      %v1756 = vpack.c.b16 %v1754, %v1753
      %1759 = vmatpush.bf16.msra.mxu0 0
      %1760 = vmatpush.bf16.msra.mxu0 0
      %1761 = vmatpush.bf16.msra.mxu0 0
      %1762 = vmatpush.bf16.msra.mxu0 0
      %1763 = vmatpush.bf16.msra.mxu0 0
      %1764 = vmatpush.bf16.msra.mxu0 0
      %1765 = vmatpush.bf16.msra.mxu0 %v1756
      %1766 = vmatpush.bf16.msra.mxu0 %v1755
      %1767 = vmatmul.bf16.gmra.mxu0 %v1657
      %v1768 = vpop.f32.mrf.mxu0
      %v1769 = vadd.f32 0.0, %v1768
      %v1770 = vpop.f32.mrf.mxu0
      %1771 = vdwg.mxu0
      %v1776 = vunpack.c.l.b16 %v1524
      %v1777 = vunpack.c.l.b16 %v1525
      %v1778 = vunpack.c.l.b16 %v1526
      %v1779 = vunpack.c.l.b16 %v1527
      %v1780 = vpack.c.b16 %v1777, %v1776
      %v1781 = vpack.c.b16 %v1779, %v1778
      %1784 = vmatpush.bf16.msra.mxu0 0
      %1785 = vmatpush.bf16.msra.mxu0 0
      %1786 = vmatpush.bf16.msra.mxu0 0
      %1787 = vmatpush.bf16.msra.mxu0 0
      %1788 = vmatpush.bf16.msra.mxu0 0
      %1789 = vmatpush.bf16.msra.mxu0 0
      %1790 = vmatpush.bf16.msra.mxu0 %v1781
      %1791 = vmatpush.bf16.msra.mxu0 %v1780
      %1792 = vmatmul.bf16.gmra.mxu0 %v1657
      %v1793 = vpop.f32.mrf.mxu0
      %v1794 = vadd.f32 0.0, %v1793
      %v1795 = vpop.f32.mrf.mxu0
      %1796 = vdwg.mxu0
      %v1801 = vunpack.c.l.b16 %v1528
      %v1802 = vunpack.c.l.b16 %v1529
      %v1803 = vunpack.c.l.b16 %v1530
      %v1804 = vunpack.c.l.b16 %v1531
      %v1805 = vpack.c.b16 %v1802, %v1801
      %v1806 = vpack.c.b16 %v1804, %v1803
      %1809 = vmatpush.bf16.msra.mxu0 0
      %1810 = vmatpush.bf16.msra.mxu0 0
      %1811 = vmatpush.bf16.msra.mxu0 0
      %1812 = vmatpush.bf16.msra.mxu0 0
      %1813 = vmatpush.bf16.msra.mxu0 0
      %1814 = vmatpush.bf16.msra.mxu0 0
      %1815 = vmatpush.bf16.msra.mxu0 %v1806
      %1816 = vmatpush.bf16.msra.mxu0 %v1805
      %1817 = vmatmul.bf16.gmra.mxu0 %v1657
      %v1818 = vpop.f32.mrf.mxu0
      %v1819 = vadd.f32 0.0, %v1818
      %v1820 = vpop.f32.mrf.mxu0
      %1821 = vdwg.mxu0
      %v1826 = vunpack.c.l.b16 %v1532
      %v1827 = vunpack.c.l.b16 %v1533
      %v1828 = vunpack.c.l.b16 %v1534
      %v1829 = vunpack.c.l.b16 %v1535
      %v1830 = vpack.c.b16 %v1827, %v1826
      %v1831 = vpack.c.b16 %v1829, %v1828
      %1834 = vmatpush.bf16.msra.mxu0 0
      %1835 = vmatpush.bf16.msra.mxu0 0
      %1836 = vmatpush.bf16.msra.mxu0 0
      %1837 = vmatpush.bf16.msra.mxu0 0
      %1838 = vmatpush.bf16.msra.mxu0 0
      %1839 = vmatpush.bf16.msra.mxu0 0
      %1840 = vmatpush.bf16.msra.mxu0 %v1831
      %1841 = vmatpush.bf16.msra.mxu0 %v1830
      %1842 = vmatmul.bf16.gmra.mxu0 %v1657
      %v1843 = vpop.f32.mrf.mxu0
      %v1844 = vadd.f32 0.0, %v1843
      %v1845 = vpop.f32.mrf.mxu0
      %1846 = vdwg.mxu0
      %v1847 = vpack.c.bf16 %v1566, %v1566
      %v1848 = vpack.c.bf16 %v1591, %v1591
      %v1849 = vpack.c.bf16 %v1616, %v1616
      %v1850 = vpack.c.bf16 %v1641, %v1641
      %v1851 = vpack.c.bf16 %v1669, %v1669
      %v1852 = vpack.c.bf16 %v1694, %v1694
      %v1853 = vpack.c.bf16 %v1719, %v1719
      %v1854 = vpack.c.bf16 %v1744, %v1744
      %v1856 = vsel %vm1158, %v1847, 0
      %v1859 = vsel %vm1158, %v1851, 0
      %1861 = vmatpush.bf16.xpose.msra.mxu0 0
      %1862 = vmatpush.bf16.xpose.msra.mxu0 0
      %1863 = vmatpush.bf16.xpose.msra.mxu0 0
      %1864 = vmatpush.bf16.xpose.msra.mxu0 0
      %1865 = vmatpush.bf16.xpose.msra.mxu0 0
      %1866 = vmatpush.bf16.xpose.msra.mxu0 0
      %1867 = vmatpush.bf16.xpose.msra.mxu0 0
      %1868 = vmatpush.bf16.xpose.msra.mxu0 %v1859
      %1869 = vmatmul.bf16.gmra.mxu0 %v1856
      %v1870 = vpop.f32.mrf.mxu0
      %v1871 = vadd.f32 %v1487, %v1870
      %v1872 = vpop.f32.mrf.mxu0
      %1873 = vdwg.mxu0
      %v1875 = vsel %vm1158, %v1848, 0
      %v1878 = vsel %vm1158, %v1852, 0
      %1880 = vmatpush.bf16.xpose.msra.mxu0 0
      %1881 = vmatpush.bf16.xpose.msra.mxu0 0
      %1882 = vmatpush.bf16.xpose.msra.mxu0 0
      %1883 = vmatpush.bf16.xpose.msra.mxu0 0
      %1884 = vmatpush.bf16.xpose.msra.mxu0 0
      %1885 = vmatpush.bf16.xpose.msra.mxu0 0
      %1886 = vmatpush.bf16.xpose.msra.mxu0 0
      %1887 = vmatpush.bf16.xpose.msra.mxu0 %v1878
      %1888 = vmatmul.bf16.gmra.mxu0 %v1875
      %v1889 = vpop.f32.mrf.mxu0
      %v1890 = vadd.f32 %v1487, %v1889
      %v1891 = vpop.f32.mrf.mxu0
      %1892 = vdwg.mxu0
      %v1894 = vsel %vm1158, %v1849, 0
      %v1897 = vsel %vm1158, %v1853, 0
      %1899 = vmatpush.bf16.xpose.msra.mxu0 0
      %1900 = vmatpush.bf16.xpose.msra.mxu0 0
      %1901 = vmatpush.bf16.xpose.msra.mxu0 0
      %1902 = vmatpush.bf16.xpose.msra.mxu0 0
      %1903 = vmatpush.bf16.xpose.msra.mxu0 0
      %1904 = vmatpush.bf16.xpose.msra.mxu0 0
      %1905 = vmatpush.bf16.xpose.msra.mxu0 0
      %1906 = vmatpush.bf16.xpose.msra.mxu0 %v1897
      %1907 = vmatmul.bf16.gmra.mxu0 %v1894
      %v1908 = vpop.f32.mrf.mxu0
      %v1909 = vadd.f32 %v1487, %v1908
      %v1910 = vpop.f32.mrf.mxu0
      %1911 = vdwg.mxu0
      %v1913 = vsel %vm1158, %v1850, 0
      %v1916 = vsel %vm1158, %v1854, 0
      %1918 = vmatpush.bf16.xpose.msra.mxu0 0
      %1919 = vmatpush.bf16.xpose.msra.mxu0 0
      %1920 = vmatpush.bf16.xpose.msra.mxu0 0
      %1921 = vmatpush.bf16.xpose.msra.mxu0 0
      %1922 = vmatpush.bf16.xpose.msra.mxu0 0
      %1923 = vmatpush.bf16.xpose.msra.mxu0 0
      %1924 = vmatpush.bf16.xpose.msra.mxu0 0
      %1925 = vmatpush.bf16.xpose.msra.mxu0 %v1916
      %1926 = vmatmul.bf16.gmra.mxu0 %v1913
      %v1927 = vpop.f32.mrf.mxu0
      %v1928 = vadd.f32 %v1487, %v1927
      %v1929 = vpop.f32.mrf.mxu0
      %1930 = vdwg.mxu0
      %v1931 = vmul.f32 %v1871, 0.17677669
      %v1932 = vmul.f32 %v1890, 0.17677669
      %v1933 = vmul.f32 %v1909, 0.17677669
      %v1934 = vmul.f32 %v1928, 0.17677669
      %v1935 = vsel %vm1158, %v1931, -inf
      %1936 = vmax.xlane.f32.xlu0 %v1935
      %v1937 = vpop.xlane.xlu0 %1936
      %v1938 = vsel %vm1158, %v1932, -inf
      %1939 = vmax.xlane.f32.xlu0 %v1938
      %v1940 = vpop.xlane.xlu0 %1939
      %v1941 = vsel %vm1158, %v1933, -inf
      %1942 = vmax.xlane.f32.xlu0 %v1941
      %v1943 = vpop.xlane.xlu0 %1942
      %v1944 = vsel %vm1158, %v1934, -inf
      %1945 = vmax.xlane.f32.xlu0 %v1944
      %v1946 = vpop.xlane.xlu0 %1945
      %v1947 = vsub.f32 %v1931, %v1937
      %v1948 = vsub.f32 %v1932, %v1940
      %v1949 = vsub.f32 %v1933, %v1943
      %v1950 = vsub.f32 %v1934, %v1946
      %v1951 = vmul.f32 %v1947, 1.442695
      %v1952 = vpow.pop %v1951
      %v1953 = vmul.f32 %v1948, 1.442695
      %v1954 = vpow.pop %v1953
      %v1955 = vmul.f32 %v1949, 1.442695
      %v1956 = vpow.pop %v1955
      %v1957 = vmul.f32 %v1950, 1.442695
      %v1958 = vpow.pop %v1957
      %v1959 = vsel %vm1158, %v1952, 0.0
      %1960 = vadd.xlane.f32.xlu0 %v1959
      %v1961 = vpop.xlane.xlu0 %1960
      %v1962 = vsel %vm1158, %v1954, 0.0
      %1963 = vadd.xlane.f32.xlu0 %v1962
      %v1964 = vpop.xlane.xlu0 %1963
      %v1965 = vsel %vm1158, %v1956, 0.0
      %1966 = vadd.xlane.f32.xlu0 %v1965
      %v1967 = vpop.xlane.xlu0 %1966
      %v1968 = vsel %vm1158, %v1958, 0.0
      %1969 = vadd.xlane.f32.xlu0 %v1968
      %v1970 = vpop.xlane.xlu0 %1969
      %v1971 = vrcp.pop %v1961
      %v1972 = vrcp.pop %v1964
      %v1973 = vrcp.pop %v1967
      %v1974 = vrcp.pop %v1970
      %v1975 = vmul.f32 %v1952, %v1971
      %v1976 = vmul.f32 %v1954, %v1972
      %v1977 = vmul.f32 %v1956, %v1973
      %v1978 = vmul.f32 %v1958, %v1974
      %v1979 = vpack.c.bf16 %v1975, %v1975
      %v1980 = vpack.c.bf16 %v1976, %v1976
      %v1981 = vpack.c.bf16 %v1977, %v1977
      %v1982 = vpack.c.bf16 %v1978, %v1978
      %v1983 = vpack.c.bf16 %v1769, %v1769
      %v1984 = vpack.c.bf16 %v1794, %v1794
      %v1985 = vpack.c.bf16 %v1819, %v1819
      %v1986 = vpack.c.bf16 %v1844, %v1844
      %v1988 = vsel %vm1158, %v1979, 0
      %v1991 = vsel %vm1294, %v1983, 0
      %1993 = vmatpush.bf16.msra.mxu0 0
      %1994 = vmatpush.bf16.msra.mxu0 0
      %1995 = vmatpush.bf16.msra.mxu0 0
      %1996 = vmatpush.bf16.msra.mxu0 0
      %1997 = vmatpush.bf16.msra.mxu0 0
      %1998 = vmatpush.bf16.msra.mxu0 0
      %1999 = vmatpush.bf16.msra.mxu0 0
      %2000 = vmatpush.bf16.msra.mxu0 %v1991
      %2001 = vmatmul.bf16.gmra.mxu0 %v1988
      %v2002 = vpop.f32.mrf.mxu0
      %v2003 = vadd.f32 0.0, %v2002
      %v2004 = vpop.f32.mrf.mxu0
      %2005 = vdwg.mxu0
      %v2007 = vsel %vm1158, %v1980, 0
      %v2010 = vsel %vm1294, %v1984, 0
      %2012 = vmatpush.bf16.msra.mxu0 0
      %2013 = vmatpush.bf16.msra.mxu0 0
      %2014 = vmatpush.bf16.msra.mxu0 0
      %2015 = vmatpush.bf16.msra.mxu0 0
      %2016 = vmatpush.bf16.msra.mxu0 0
      %2017 = vmatpush.bf16.msra.mxu0 0
      %2018 = vmatpush.bf16.msra.mxu0 0
      %2019 = vmatpush.bf16.msra.mxu0 %v2010
      %2020 = vmatmul.bf16.gmra.mxu0 %v2007
      %v2021 = vpop.f32.mrf.mxu0
      %v2022 = vadd.f32 0.0, %v2021
      %v2023 = vpop.f32.mrf.mxu0
      %2024 = vdwg.mxu0
      %v2026 = vsel %vm1158, %v1981, 0
      %v2029 = vsel %vm1294, %v1985, 0
      %2031 = vmatpush.bf16.msra.mxu0 0
      %2032 = vmatpush.bf16.msra.mxu0 0
      %2033 = vmatpush.bf16.msra.mxu0 0
      %2034 = vmatpush.bf16.msra.mxu0 0
      %2035 = vmatpush.bf16.msra.mxu0 0
      %2036 = vmatpush.bf16.msra.mxu0 0
      %2037 = vmatpush.bf16.msra.mxu0 0
      %2038 = vmatpush.bf16.msra.mxu0 %v2029
      %2039 = vmatmul.bf16.gmra.mxu0 %v2026
      %v2040 = vpop.f32.mrf.mxu0
      %v2041 = vadd.f32 0.0, %v2040
      %v2042 = vpop.f32.mrf.mxu0
      %2043 = vdwg.mxu0
      %v2045 = vsel %vm1158, %v1982, 0
      %v2048 = vsel %vm1294, %v1986, 0
      %2050 = vmatpush.bf16.msra.mxu0 0
      %2051 = vmatpush.bf16.msra.mxu0 0
      %2052 = vmatpush.bf16.msra.mxu0 0
      %2053 = vmatpush.bf16.msra.mxu0 0
      %2054 = vmatpush.bf16.msra.mxu0 0
      %2055 = vmatpush.bf16.msra.mxu0 0
      %2056 = vmatpush.bf16.msra.mxu0 0
      %2057 = vmatpush.bf16.msra.mxu0 %v2048
      %2058 = vmatmul.bf16.gmra.mxu0 %v2045
      %v2059 = vpop.f32.mrf.mxu0
      %v2060 = vadd.f32 0.0, %v2059
      %v2061 = vpop.f32.mrf.mxu0
      %2062 = vdwg.mxu0
      %v2063 = vpack.c.bf16 %v2003, %v2003
      %v2064 = vpack.c.bf16 %v2022, %v2022
      %v2065 = vpack.c.bf16 %v2041, %v2041
      %v2066 = vpack.c.bf16 %v2060, %v2060
      %v2068 = vsel %vm1158, %v2063, 0
      %v2071 = vsel %vm1294, %v1536, 0
      %2073 = vmatpush.bf16.msra.mxu0 0
      %2074 = vmatpush.bf16.msra.mxu0 0
      %2075 = vmatpush.bf16.msra.mxu0 0
      %2076 = vmatpush.bf16.msra.mxu0 0
      %2077 = vmatpush.bf16.msra.mxu0 0
      %2078 = vmatpush.bf16.msra.mxu0 0
      %2079 = vmatpush.bf16.msra.mxu0 0
      %2080 = vmatpush.bf16.msra.mxu0 %v2071
      %2081 = vmatmul.bf16.gmra.mxu0 %v2068
      %v2082 = vpop.f32.mrf.mxu0
      %v2083 = vadd.f32 0.0, %v2082
      %v2084 = vpop.f32.mrf.mxu0
      %2085 = vdwg.mxu0
      %v2087 = vsel %vm1158, %v2064, 0
      %v2090 = vsel %vm1294, %v1537, 0
      %2092 = vmatpush.bf16.msra.mxu0 0
      %2093 = vmatpush.bf16.msra.mxu0 0
      %2094 = vmatpush.bf16.msra.mxu0 0
      %2095 = vmatpush.bf16.msra.mxu0 0
      %2096 = vmatpush.bf16.msra.mxu0 0
      %2097 = vmatpush.bf16.msra.mxu0 0
      %2098 = vmatpush.bf16.msra.mxu0 0
      %2099 = vmatpush.bf16.msra.mxu0 %v2090
      %2100 = vmatmul.bf16.gmra.mxu0 %v2087
      %v2101 = vpop.f32.mrf.mxu0
      %v2102 = vadd.f32 0.0, %v2101
      %v2103 = vpop.f32.mrf.mxu0
      %2104 = vdwg.mxu0
      %v2106 = vsel %vm1158, %v2065, 0
      %v2109 = vsel %vm1294, %v1538, 0
      %2111 = vmatpush.bf16.msra.mxu0 0
      %2112 = vmatpush.bf16.msra.mxu0 0
      %2113 = vmatpush.bf16.msra.mxu0 0
      %2114 = vmatpush.bf16.msra.mxu0 0
      %2115 = vmatpush.bf16.msra.mxu0 0
      %2116 = vmatpush.bf16.msra.mxu0 0
      %2117 = vmatpush.bf16.msra.mxu0 0
      %2118 = vmatpush.bf16.msra.mxu0 %v2109
      %2119 = vmatmul.bf16.gmra.mxu0 %v2106
      %v2120 = vpop.f32.mrf.mxu0
      %v2121 = vadd.f32 0.0, %v2120
      %v2122 = vpop.f32.mrf.mxu0
      %2123 = vdwg.mxu0
      %v2125 = vsel %vm1158, %v2066, 0
      %v2128 = vsel %vm1294, %v1539, 0
      %2130 = vmatpush.bf16.msra.mxu0 0
      %2131 = vmatpush.bf16.msra.mxu0 0
      %2132 = vmatpush.bf16.msra.mxu0 0
      %2133 = vmatpush.bf16.msra.mxu0 0
      %2134 = vmatpush.bf16.msra.mxu0 0
      %2135 = vmatpush.bf16.msra.mxu0 0
      %2136 = vmatpush.bf16.msra.mxu0 0
      %2137 = vmatpush.bf16.msra.mxu0 %v2128
      %2138 = vmatmul.bf16.gmra.mxu0 %v2125
      %v2139 = vpop.f32.mrf.mxu0
      %v2140 = vadd.f32 0.0, %v2139
      %v2141 = vpop.f32.mrf.mxu0
      %2142 = vdwg.mxu0
      %v2143 = vadd.f32 %v2083, %v2102
      %v2144 = vadd.f32 %v2143, %v2121
      %v2145 = vadd.f32 %v2144, %v2140
      %v2146 = vperm.slane %v790, 3
      %v2147 = vadd.f32 %v2145, %v2146
      %v2148 = vadd.f32 %v2147, %v1486
      %v2149 = vsel %vm858, %v2148, 0.0
      %2150 = vadd.xlane.f32.xlu0 %v2149
      %v2151 = vpop.xlane.xlu0 %2150
      %v2152 = vmul.f32 %v2151, %v1463
      %v2153 = vsub.f32 %v2148, %v2152
      %v2154 = vmul.f32 %v2153, %v2153
      %v2155 = vsel %vm858, %v2154, 0.0
      %2156 = vadd.xlane.f32.xlu0 %v2155
      %v2157 = vpop.xlane.xlu0 %2156
      %v2158 = vmul.f32 %v2157, %v1463
      %v2159 = vadd.f32 %v2158, 1e-05
      %v2160 = vrsqrt.pop %v2159
      %v2161 = vmul.f32 %v2160, %v2159
      %v2162 = vmul.f32 %v2161, %v2160
      %v2163 = vmul.f32 0.5, %v2162
      %v2164 = vsub.f32 1.5, %v2163
      %v2165 = vmul.f32 %v2160, %v2164
      %vm2166 = vweird.f32 %v2159
      %vm2167 = vweird.f32 %v2160
      %vm2168 = vmor %vm2166, %vm2167
      %v2169 = vsel %vm2168, %v2160, %v2165
      %v2170 = vmul.f32 %v2153, %v2169
      %v2171 = vperm.slane %v790, 4
      %v2172 = vmul.f32 %v2170, %v2171
      %v2173 = vperm.slane %v790, 5
      %v2174 = vadd.f32 %v2172, %v2173
      %v2175 = vpack.c.bf16 %v2174, %v2174
      %v2176 = vld [vmem:[%s762] sm:$0xf]
      %v2177 = vld [vmem:[%s762 + $0x4] sm:$0xf]
      %v2178 = vld [vmem:[%s762 + $0x8] sm:$0xf]
      %v2179 = vld [vmem:[%s762 + $0xc] sm:$0xf]
      %v2180 = vld [vmem:[%s770] sm:$0x1]
      %v2182 = vperm.slane %v2180, 0
      %v2188 = vunpack.c.l.b16 %v2176
      %v2189 = vunpack.c.l.b16 %v2177
      %v2190 = vunpack.c.l.b16 %v2178
      %v2191 = vunpack.c.l.b16 %v2179
      %v2192 = vpack.c.b16 %v2189, %v2188
      %v2193 = vpack.c.b16 %v2191, %v2190
      %v2197 = vsel %vm858, %v2175, 0
      %2199 = vmatpush.bf16.msra.mxu0 0
      %2200 = vmatpush.bf16.msra.mxu0 0
      %2201 = vmatpush.bf16.msra.mxu0 0
      %2202 = vmatpush.bf16.msra.mxu0 0
      %2203 = vmatpush.bf16.msra.mxu0 0
      %2204 = vmatpush.bf16.msra.mxu0 0
      %2205 = vmatpush.bf16.msra.mxu0 %v2193
      %2206 = vmatpush.bf16.msra.mxu0 %v2192
      %2207 = vmatmul.bf16.gmra.mxu0 %v2197
      %v2208 = vpop.f32.mrf.mxu0
      %v2209 = vadd.f32 %v2182, %v2208
      %v2210 = vpop.f32.mrf.mxu0
      %2211 = vdwg.mxu0
      %v2212 = vmax.f32 %v2209, 0.0
      %v2213 = vpack.c.bf16 %v2212, %v2212
      %v2214 = vld [vmem:[%s767] sm:$0xf]
      %v2215 = vld [vmem:[%s767 + $0x4] sm:$0xf]
      %v2216 = vld [vmem:[%s767 + $0x8] sm:$0xf]
      %v2217 = vld [vmem:[%s767 + $0xc] sm:$0xf]
      %v2218 = vld [vmem:[%s767 + $0x10] sm:$0xf]
      %v2219 = vld [vmem:[%s767 + $0x14] sm:$0xf]
      %v2220 = vld [vmem:[%s767 + $0x18] sm:$0xf]
      %v2221 = vld [vmem:[%s767 + $0x1c] sm:$0xf]
      %v2222 = vperm.slane %v790, 6
      %v2231 = vunpack.c.l.b16 %v2214
      %v2232 = vunpack.c.l.b16 %v2215
      %v2233 = vunpack.c.l.b16 %v2216
      %v2234 = vunpack.c.l.b16 %v2217
      %v2235 = vunpack.c.l.b16 %v2218
      %v2236 = vunpack.c.l.b16 %v2219
      %v2237 = vunpack.c.l.b16 %v2220
      %v2238 = vunpack.c.l.b16 %v2221
      %v2239 = vpack.c.b16 %v2232, %v2231
      %v2240 = vpack.c.b16 %v2234, %v2233
      %v2241 = vpack.c.b16 %v2236, %v2235
      %v2242 = vpack.c.b16 %v2238, %v2237
      %vm2247 = vcmask 523264
      %v2249 = vsel %vm2247, %v2213, 0
      %2251 = vmatpush.bf16.msra.mxu0 0
      %2252 = vmatpush.bf16.msra.mxu0 0
      %2253 = vmatpush.bf16.msra.mxu0 0
      %2254 = vmatpush.bf16.msra.mxu0 0
      %2255 = vmatpush.bf16.msra.mxu0 %v2242
      %2256 = vmatpush.bf16.msra.mxu0 %v2241
      %2257 = vmatpush.bf16.msra.mxu0 %v2240
      %2258 = vmatpush.bf16.msra.mxu0 %v2239
      %2259 = vmatmul.bf16.gmra.mxu0 %v2249
      %v2260 = vpop.f32.mrf.mxu0
      %v2261 = vadd.f32 %v2222, %v2260
      %v2262 = vpop.f32.mrf.mxu0
      %2263 = vdwg.mxu0
      %v2264 = vadd.f32 %v2261, %v2174
      %v2265 = vsel %vm858, %v2264, 0.0
      %2266 = vadd.xlane.f32.xlu0 %v2265
      %v2267 = vpop.xlane.xlu0 %2266
      %v2268 = vmul.f32 %v2267, %v1463
      %v2269 = vsub.f32 %v2264, %v2268
      %v2270 = vmul.f32 %v2269, %v2269
      %v2271 = vsel %vm858, %v2270, 0.0
      %2272 = vadd.xlane.f32.xlu0 %v2271
      %v2273 = vpop.xlane.xlu0 %2272
      %v2274 = vmul.f32 %v2273, %v1463
      %v2275 = vadd.f32 %v2274, 1e-05
      %v2276 = vrsqrt.pop %v2275
      %v2277 = vmul.f32 %v2276, %v2275
      %v2278 = vmul.f32 %v2277, %v2276
      %v2279 = vmul.f32 0.5, %v2278
      %v2280 = vsub.f32 1.5, %v2279
      %v2281 = vmul.f32 %v2276, %v2280
      %vm2282 = vweird.f32 %v2275
      %vm2283 = vweird.f32 %v2276
      %vm2284 = vmor %vm2282, %vm2283
      %v2285 = vsel %vm2284, %v2276, %v2281
      %v2286 = vmul.f32 %v2269, %v2285
      %v2287 = vperm.slane %v790, 7
      %v2288 = vmul.f32 %v2286, %v2287
      %v2289 = vperm.slane %v791, 0
      %v2290 = vadd.f32 %v2288, %v2289
      %2291 = vst.msk [vmem:[#allocation2] sm:$0xff] %vm858, %v2290
      %p2292 = scmp.eq.s32.totalorder %s32, 1
      // Predicated region
      $region89: #{decoder_forward.2} parent=83 // pred_check
        %p2293 = pneg %p2292
      $region90: #{decoder_forward.2} parent=83 // pred_check_branch
        %2295 = sbr.rel (%p2293) target = $region92
      $region91: #{decoder_forward.2} parent=83 // pred_region
        %2296 = vst.msk [vmem:[%s779] sm:$0xff] %vm858, %v2290
      $region92: #{decoder_forward.2} parent=83 // pred_fallthru
        _
      %p2297 = scmp.lt.s32.totalorder %s31, 1
      %s2298 = scalar_select %p2297, %s31, 1
      %s2299 = smul.addr %s2298, 8
      %s2300 = scalar_lea.vmem %s16, %s2299
      // Predicated region
      $region93: #{decoder_forward.2} parent=83 // pred_check
        %p2301 = pneg %p463
      $region94: #{decoder_forward.2} parent=83 // pred_check_branch
        %2303 = sbr.rel (%p2301) target = $region96
      $region95: #{decoder_forward.2} parent=83 // pred_region
        _
      $region96: #{decoder_forward.2} parent=83 // pred_fallthru
        _
    $region84: #{decoder_forward.2} parent=5 // pred_fallthru
      _
    %p2304 = scmp.le.s32.totalorder 2, %s22
    // Predicated region
    $region97: #{decoder_forward.2} parent=5 // pred_check
      %p2305 = pneg %p2304
    $region98: #{decoder_forward.2} parent=5 // pred_check_branch
      %2307 = sbr.rel (%p2305) target = $region100
    $region99: #{decoder_forward.2} parent=5 // pred_region
      %s2308 = ssub.s32 %s22, 2
      // Predicated region
      $region101: #{decoder_forward.2} parent=99 // pred_check
        %p2309 = pneg %p469
      $region102: #{decoder_forward.2} parent=99 // pred_check_branch
        %2311 = sbr.rel (%p2309) target = $region104
      $region103: #{decoder_forward.2} parent=99 // pred_region
        %p2312 = scmp.lt.s32.totalorder %s33, 1
        %s2313 = scalar_select %p2312, %s33, 1
        %s2314 = smul.addr %s2313, 8
        %s2315 = scalar_lea.vmem %s16, %s2314
      $region104: #{decoder_forward.2} parent=99 // pred_fallthru
        _
    $region100: #{decoder_forward.2} parent=5 // pred_fallthru
      _
  $region6: #{decoder_forward.2} parent=0 // loop_footer
    %s26 = sadd.s32 1, %s22
  $region7: #{decoder_forward.2} parent=0 // loop_footer_branch
    %21 = sbr.rel target = $region3
  $region8: #{decoder_forward.2} parent=0 // loop_exit
    _

</llo_original>
